<compile_context>
chip_gen: v7x
topology: tpu7x:2x2x1
jax: 0.10.0
libtpu: 0.0.40
codegen_flags: <defaults>
</compile_context>

<pallas_src>
import functools

import jax
import jax.numpy as jnp
from jax.experimental import pallas as pl
from jax.experimental.pallas import tpu as pltpu


# ----------------------------- chip / tiling helpers -----------------------------
def _vmem_capacity_bytes():
    """Physical VMEM capacity; conservative (v7x-sized) fallback if unavailable."""
    try:
        info = pltpu.get_tpu_info()
        cap = getattr(info, "vmem_capacity_bytes", None)
        if cap:
            return int(min(max(int(cap), 16 * 1024 * 1024), 256 * 1024 * 1024))
    except Exception:
        pass
    return 64 * 1024 * 1024


def _pick_tile(full, unit, cap):
    """Largest divisor of `full` that is a multiple of `unit` and <= cap.
    Returns `full` if full <= cap; None if no aligned divisor exists."""
    if full <= cap:
        return full
    t = (min(cap, full) // unit) * unit
    while t >= unit:
        if full % t == 0:
            return t
        t -= unit
    return None


def _pick_c_s_tiles(C, HW, itemsize, block_byte_cap):
    """(c_tile, s_tile) for a (1, c_tile, s_tile) block: each dim is either an
    aligned divisor (8 / 128) or the full extent (always legal), and the x-block
    byte size is kept near block_byte_cap."""
    if HW % 128 == 0:
        s_cap = max(128, block_byte_cap // (itemsize * 8))
        s_tile = _pick_tile(HW, 128, min(HW, s_cap)) or HW
    else:
        s_tile = HW                      # full extent (legal for any size)
    if C % 8 == 0:
        c_cap = max(8, block_byte_cap // (itemsize * s_tile))
        c_tile = _pick_tile(C, 8, min(C, c_cap)) or 8
    else:
        c_tile = C                       # full extent (legal for any size)
    return c_tile, s_tile


# ------------------------- conv + sigmoid on flat maps ---------------------------
def _conv_sigmoid_flat(mean_f, max_f, col, wv, *, K, W, HW):
    """Zero-padded KxK cross-correlation of the 2-channel (mean, max) map computed
    on flat (1, H*W) f32 vectors, followed by sigmoid.

    Row offsets are flat shifts by multiples of W (zero padded at the ends, which
    exactly reproduces the top/bottom zero padding). Column offsets are flat
    shifts by |d| < W masked with the precomputed column-index vector `col`
    (masking removes the between-row wrap-around and reproduces left/right
    zero padding). All MACs are scalar*vector on the VPU."""
    p = K // 2
    pw = p * W
    mean_rp = jnp.pad(mean_f, ((0, 0), (pw, pw)))
    max_rp = jnp.pad(max_f, ((0, 0), (pw, pw)))
    mean_rows = [mean_rp[:, ki * W: ki * W + HW] for ki in range(K)]
    max_rows = [max_rp[:, ki * W: ki * W + HW] for ki in range(K)]

    acc = jnp.zeros((1, HW), jnp.float32)
    for kj in range(K):
        # Partial sum over (channel, row offset) for this column offset.
        pcol = jnp.zeros((1, HW), jnp.float32)
        for ki in range(K):
            pcol = pcol + wv[ki * K + kj] * mean_rows[ki]           # mean channel
            pcol = pcol + wv[K * K + ki * K + kj] * max_rows[ki]    # max channel
        d = kj - p
        if d == 0:
            acc = acc + pcol
        else:
            pcol_cp = jnp.pad(pcol, ((0, 0), (p, p)))
            shifted = pcol_cp[:, kj: kj + HW]
            valid = (col >= -d) if d < 0 else (col < W - d)
            acc = acc + jnp.where(valid, shifted, 0.0)
    return jax.nn.sigmoid(acc)


# --------------------------------- kernels ---------------------------------------
def _fused_kernel(x_ref, col_ref, w_ref, o_ref, *, K, C, H, W):
    """Read-once/write-once path: grid=(B,), whole per-batch slab resident."""
    HW = H * W
    x32 = x_ref[0].astype(jnp.float32)                         # (C, HW)
    mean_f = jnp.sum(x32, axis=0, keepdims=True) * (1.0 / C)    # (1, HW)
    max_f = jnp.max(x32, axis=0, keepdims=True)                 # (1, HW)
    wv = [w_ref[i] for i in range(2 * K * K)]                   # hoisted SMEM reads
    attn = _conv_sigmoid_flat(mean_f, max_f, col_ref[...], wv, K=K, W=W, HW=HW)
    o_ref[0] = (x32 * attn).astype(o_ref.dtype)


def _reduce_kernel(x_ref, stats_ref, sum_sc, max_sc, *, C):
    """Channel mean/max reduction on the lane-dense (c_tile, s_tile) block."""
    c_idx = pl.program_id(2)

    @pl.when(c_idx == 0)
    def _():
        sum_sc[...] = jnp.zeros_like(sum_sc)
        max_sc[...] = jnp.full_like(max_sc, -jnp.inf)

    x = x_ref[0].astype(jnp.float32)                            # (c_tile, s_tile)
    sum_sc[...] = sum_sc[...] + jnp.sum(x, axis=0, keepdims=True)
    max_sc[...] = jnp.maximum(max_sc[...], jnp.max(x, axis=0, keepdims=True))

    @pl.when(c_idx == pl.num_programs(2) - 1)
    def _():
        stats_ref[0, 0:1, :] = sum_sc[...] * (1.0 / C)          # mean
        stats_ref[0, 1:2, :] = max_sc[...]                      # max


def _conv_kernel(stats_ref, col_ref, w_ref, attn_ref, *, K, H, W):
    """Tiny per-batch conv + sigmoid on the flat stats maps."""
    HW = H * W
    mean_f = stats_ref[0, 0:1, :]
    max_f = stats_ref[0, 1:2, :]
    wv = [w_ref[i] for i in range(2 * K * K)]
    attn = _conv_sigmoid_flat(mean_f, max_f, col_ref[...], wv, K=K, W=W, HW=HW)
    attn_ref[0] = attn.astype(attn_ref.dtype)


def _apply_kernel(x_ref, a_ref, o_ref):
    """Lane-dense broadcast multiply: (1, c_tile, s_tile) * (1, 1, s_tile)."""
    o_ref[...] = (x_ref[...] * a_ref[...]).astype(o_ref.dtype)


# --------------------------------- wrapper ----------------------------------------
def spatial_attention(x, weight, kernel_size=7, *, force_two_pass=False,
                      max_block_bytes=None):
    """x: (B, C, H, W); weight: (1, 2, K, K), no bias. Returns x * attn."""
    assert kernel_size in (3, 7), "kernel size must be 3 or 7"
    B, C, H, W = x.shape
    K = kernel_size
    HW = H * W
    xbytes = jnp.dtype(x.dtype).itemsize

    w_flat = weight.reshape(-1).astype(jnp.float32)                  # (2*K*K,)
    col_ids = (jnp.arange(HW, dtype=jnp.int32) % W).reshape(1, HW)   # column index

    cap = _vmem_capacity_bytes()
    budget = int(cap * 0.70)            # total budget for pipelined buffers
    vmem_limit = int(cap * 0.85)        # scoped VMEM limit handed to Mosaic

    # bf16 attention map when x is bf16/f16 (bf16 VALU on v6e/v7x; numerics still
    # match the f32-accumulated conv since the cast happens after sigmoid).
    attn_dtype = x.dtype if (jnp.issubdtype(x.dtype, jnp.floating) and xbytes == 2) \
        else jnp.float32

    x2 = x.reshape(B, C, HW)            # zero-copy lane-dense view

    # ---------------- size-gated single-pass fusion (read x once) ----------------
    fused_need = 4 * C * HW * xbytes + C * HW * 4 + (4 * K + 12) * HW * 4
    if not force_two_pass and fused_need <= budget:
        out2 = pl.pallas_call(
            functools.partial(_fused_kernel, K=K, C=C, H=H, W=W),
            out_shape=jax.ShapeDtypeStruct((B, C, HW), x.dtype),
            grid=(B,),
            in_specs=[
                pl.BlockSpec((1, C, HW), lambda b: (b, 0, 0)),
                pl.BlockSpec((1, HW), lambda b: (0, 0)),
                pl.BlockSpec(memory_space=pltpu.MemorySpace.SMEM),
            ],
            out_specs=pl.BlockSpec((1, C, HW), lambda b: (b, 0, 0)),
            compiler_params=pltpu.CompilerParams(
                dimension_semantics=("parallel",),
                vmem_limit_bytes=vmem_limit),
            cost_estimate=pl.CostEstimate(
                flops=int(B * HW * (3 * C + 4 * K * K)),
                transcendentals=int(B * HW),
                bytes_accessed=int(2 * B * C * HW * xbytes + HW * 4)),
        )(x2, col_ids, w_flat)
        return out2.reshape(B, C, H, W)

    # ----------------------------- two-pass fallback -----------------------------
    # Pass 1a: lane-dense channel mean/max reduction -> stats (B, 2, HW) f32.
    blk_cap1 = max_block_bytes if max_block_bytes else max(budget // 3, 1)
    c_tile1, s_tile1 = _pick_c_s_tiles(C, HW, xbytes, blk_cap1)
    n_c1, n_s1 = C // c_tile1, HW // s_tile1

    stats = pl.pallas_call(
        functools.partial(_reduce_kernel, C=C),
        out_shape=jax.ShapeDtypeStruct((B, 2, HW), jnp.float32),
        grid=(B, n_s1, n_c1),
        in_specs=[pl.BlockSpec((1, c_tile1, s_tile1), lambda b, s, c: (b, c, s))],
        out_specs=pl.BlockSpec((1, 2, s_tile1), lambda b, s, c: (b, 0, s)),
        scratch_shapes=[pltpu.VMEM((1, s_tile1), jnp.float32),
                        pltpu.VMEM((1, s_tile1), jnp.float32)],
        compiler_params=pltpu.CompilerParams(
            dimension_semantics=("parallel", "parallel", "arbitrary"),
            vmem_limit_bytes=vmem_limit),
        cost_estimate=pl.CostEstimate(
            flops=int(2 * B * C * HW), transcendentals=0,
            bytes_accessed=int(B * C * HW * xbytes + B * 2 * HW * 4)),
    )(x2)

    # Pass 1b: tiny per-batch conv + sigmoid on flat maps -> attn (B, 1, HW).
    attn = pl.pallas_call(
        functools.partial(_conv_kernel, K=K, H=H, W=W),
        out_shape=jax.ShapeDtypeStruct((B, 1, HW), attn_dtype),
        grid=(B,),
        in_specs=[
            pl.BlockSpec((1, 2, HW), lambda b: (b, 0, 0)),
            pl.BlockSpec((1, HW), lambda b: (0, 0)),
            pl.BlockSpec(memory_space=pltpu.MemorySpace.SMEM),
        ],
        out_specs=pl.BlockSpec((1, 1, HW), lambda b: (b, 0, 0)),
        compiler_params=pltpu.CompilerParams(
            dimension_semantics=("parallel",),
            vmem_limit_bytes=vmem_limit),
        cost_estimate=pl.CostEstimate(
            flops=int(4 * B * K * K * HW), transcendentals=int(B * HW),
            bytes_accessed=int(B * HW * (2 * 4 + jnp.dtype(attn_dtype).itemsize))),
    )(stats, col_ids, w_flat)

    # Pass 2: lane-dense multiply; attn block index constant over innermost C axis.
    blk_cap2 = max_block_bytes if max_block_bytes else max(budget // 5, 1)
    c_tile2, s_tile2 = _pick_c_s_tiles(C, HW, xbytes, blk_cap2)
    n_c2, n_s2 = C // c_tile2, HW // s_tile2

    out2 = pl.pallas_call(
        _apply_kernel,
        out_shape=jax.ShapeDtypeStruct((B, C, HW), x.dtype),
        grid=(B, n_s2, n_c2),
        in_specs=[
            pl.BlockSpec((1, c_tile2, s_tile2), lambda b, s, c: (b, c, s)),
            pl.BlockSpec((1, 1, s_tile2), lambda b, s, c: (b, 0, s)),
        ],
        out_specs=pl.BlockSpec((1, c_tile2, s_tile2), lambda b, s, c: (b, c, s)),
        compiler_params=pltpu.CompilerParams(
            dimension_semantics=("parallel", "parallel", "parallel"),
            vmem_limit_bytes=vmem_limit),
        cost_estimate=pl.CostEstimate(
            flops=int(B * C * HW), transcendentals=0,
            bytes_accessed=int(2 * B * C * HW * xbytes
                               + B * HW * jnp.dtype(attn_dtype).itemsize)),
    )(x2, attn)

    return out2.reshape(B, C, H, W)


# --------------------------------- reference --------------------------------------
def _reference(x, weight):
    """Pure-JAX reference mirroring the PyTorch forward (for verification)."""
    mean_c = jnp.mean(x, axis=1, keepdims=True)
    max_c = jnp.max(x, axis=1, keepdims=True)
    feat = jnp.concatenate([mean_c, max_c], axis=1)              # (B, 2, H, W)
    pad = weight.shape[-1] // 2
    conv = jax.lax.conv_general_dilated(
        feat, weight, window_strides=(1, 1),
        padding=((pad, pad), (pad, pad)),
        dimension_numbers=("NCHW", "OIHW", "NCHW"),
        precision=jax.lax.Precision.HIGHEST)
    return x * jax.nn.sigmoid(conv)


if __name__ == "__main__":
    key = jax.random.PRNGKey(0)
    k1, k2, k3, k4 = jax.random.split(key, 4)

    # Spec shape: B=2, C=4, H=W=16, kernel_size=7.
    B, C, H, W, K = 2, 4, 16, 16, 7
    x = jax.random.normal(k1, (B, C, H, W), dtype=jnp.float32)
    weight = (jax.random.normal(k2, (1, 2, K, K), dtype=jnp.float32)
              * (1.0 / (2 * K * K)) ** 0.5)
    ref = _reference(x, weight)

    # Auto path (small slab -> fused read-once/write-once kernel).
    out = jax.block_until_ready(spatial_attention(x, weight, kernel_size=K))
    assert out.shape == (B, C, H, W)
    assert jnp.allclose(out, ref, atol=1e-5, rtol=1e-5), "fused path mismatch"

    # Two-pass fallback path on the same inputs.
    out_tp = jax.block_until_ready(
        spatial_attention(x, weight, kernel_size=K, force_two_pass=True))
    assert jnp.allclose(out_tp, ref, atol=1e-5, rtol=1e-5), "two-pass path mismatch"

    # Exercise kernel_size=3 plus multi-step tiling (n_c>1, n_s>1) on the two-pass
    # path by forcing a tiny per-block byte budget.
    B2, C2, H2, W2, K2 = 1, 16, 16, 16, 3
    xb = jax.random.normal(k3, (B2, C2, H2, W2), dtype=jnp.float32)
    wb = (jax.random.normal(k4, (1, 2, K2, K2), dtype=jnp.float32)
          * (1.0 / (2 * K2 * K2)) ** 0.5)
    refb = _reference(xb, wb)
    out_b = jax.block_until_ready(
        spatial_attention(xb, wb, kernel_size=K2,
                          force_two_pass=True, max_block_bytes=4096))
    assert jnp.allclose(out_b, refb, atol=1e-5, rtol=1e-5), "tiled two-pass mismatch"

    print("KERNEL_OK")
</pallas_src>

<mosaic_0001>
module attributes {stable_mosaic.version = 11 : i64} {
  func.func @_fused_kernel(%arg0: i32, %arg1: memref<1x4x256xf32, #tpu.memory_space<vmem>>, %arg2: memref<1x256xi32, #tpu.memory_space<vmem>>, %arg3: memref<98xf32, #tpu.memory_space<smem>>, %arg4: memref<1x4x256xf32, #tpu.memory_space<vmem>>) attributes {dimension_semantics = [#tpu.dimension_semantics<parallel>], iteration_bounds = array<i64: 2>, scalar_prefetch = 0 : i64, scratch_operands = 0 : i64, tpu.core_type = #tpu.core_type<tc>, window_params = [{transform_indices = @transform_0, window_bounds = array<i64: 1, 4, 256>}, {pipeline_mode = #tpu.pipeline_mode<synchronous>, transform_indices = @transform_1, window_bounds = array<i64: 1, 256>}, {transform_indices = @transform_2, window_bounds = array<i64: 98>}, {transform_indices = @transform_3, window_bounds = array<i64: 1, 4, 256>}]} {
    %c0 = arith.constant 0 : index
    %c0_0 = arith.constant 0 : index
    %c0_1 = arith.constant 0 : index
    %0 = vector.load %arg1[%c0, %c0_0, %c0_1] : memref<1x4x256xf32, #tpu.memory_space<vmem>>, vector<1x4x256xf32>
    %1 = vector.shape_cast %0 : vector<1x4x256xf32> to vector<4x256xf32>
    %cst = arith.constant dense<0.000000e+00> : vector<256xf32>
    %2 = vector.multi_reduction <add>, %1, %cst [0] : vector<4x256xf32> to vector<256xf32>
    %3 = vector.shape_cast %2 : vector<256xf32> to vector<1x256xf32>
    %cst_2 = arith.constant 2.500000e-01 : f32
    %4 = vector.broadcast %cst_2 : f32 to vector<1x256xf32>
    %5 = arith.mulf %3, %4 : vector<1x256xf32>
    %cst_3 = arith.constant dense<0xFF800000> : vector<256xf32>
    %6 = vector.multi_reduction <maximumf>, %1, %cst_3 [0] : vector<4x256xf32> to vector<256xf32>
    %7 = vector.shape_cast %6 : vector<256xf32> to vector<1x256xf32>
    %c0_4 = arith.constant 0 : index
    %8 = memref.load %arg3[%c0_4] : memref<98xf32, #tpu.memory_space<smem>>
    %c1 = arith.constant 1 : index
    %9 = memref.load %arg3[%c1] : memref<98xf32, #tpu.memory_space<smem>>
    %c2 = arith.constant 2 : index
    %10 = memref.load %arg3[%c2] : memref<98xf32, #tpu.memory_space<smem>>
    %c3 = arith.constant 3 : index
    %11 = memref.load %arg3[%c3] : memref<98xf32, #tpu.memory_space<smem>>
    %c4 = arith.constant 4 : index
    %12 = memref.load %arg3[%c4] : memref<98xf32, #tpu.memory_space<smem>>
    %c5 = arith.constant 5 : index
    %13 = memref.load %arg3[%c5] : memref<98xf32, #tpu.memory_space<smem>>
    %c6 = arith.constant 6 : index
    %14 = memref.load %arg3[%c6] : memref<98xf32, #tpu.memory_space<smem>>
    %c7 = arith.constant 7 : index
    %15 = memref.load %arg3[%c7] : memref<98xf32, #tpu.memory_space<smem>>
    %c8 = arith.constant 8 : index
    %16 = memref.load %arg3[%c8] : memref<98xf32, #tpu.memory_space<smem>>
    %c9 = arith.constant 9 : index
    %17 = memref.load %arg3[%c9] : memref<98xf32, #tpu.memory_space<smem>>
    %c10 = arith.constant 10 : index
    %18 = memref.load %arg3[%c10] : memref<98xf32, #tpu.memory_space<smem>>
    %c11 = arith.constant 11 : index
    %19 = memref.load %arg3[%c11] : memref<98xf32, #tpu.memory_space<smem>>
    %c12 = arith.constant 12 : index
    %20 = memref.load %arg3[%c12] : memref<98xf32, #tpu.memory_space<smem>>
    %c13 = arith.constant 13 : index
    %21 = memref.load %arg3[%c13] : memref<98xf32, #tpu.memory_space<smem>>
    %c14 = arith.constant 14 : index
    %22 = memref.load %arg3[%c14] : memref<98xf32, #tpu.memory_space<smem>>
    %c15 = arith.constant 15 : index
    %23 = memref.load %arg3[%c15] : memref<98xf32, #tpu.memory_space<smem>>
    %c16 = arith.constant 16 : index
    %24 = memref.load %arg3[%c16] : memref<98xf32, #tpu.memory_space<smem>>
    %c17 = arith.constant 17 : index
    %25 = memref.load %arg3[%c17] : memref<98xf32, #tpu.memory_space<smem>>
    %c18 = arith.constant 18 : index
    %26 = memref.load %arg3[%c18] : memref<98xf32, #tpu.memory_space<smem>>
    %c19 = arith.constant 19 : index
    %27 = memref.load %arg3[%c19] : memref<98xf32, #tpu.memory_space<smem>>
    %c20 = arith.constant 20 : index
    %28 = memref.load %arg3[%c20] : memref<98xf32, #tpu.memory_space<smem>>
    %c21 = arith.constant 21 : index
    %29 = memref.load %arg3[%c21] : memref<98xf32, #tpu.memory_space<smem>>
    %c22 = arith.constant 22 : index
    %30 = memref.load %arg3[%c22] : memref<98xf32, #tpu.memory_space<smem>>
    %c23 = arith.constant 23 : index
    %31 = memref.load %arg3[%c23] : memref<98xf32, #tpu.memory_space<smem>>
    %c24 = arith.constant 24 : index
    %32 = memref.load %arg3[%c24] : memref<98xf32, #tpu.memory_space<smem>>
    %c25 = arith.constant 25 : index
    %33 = memref.load %arg3[%c25] : memref<98xf32, #tpu.memory_space<smem>>
    %c26 = arith.constant 26 : index
    %34 = memref.load %arg3[%c26] : memref<98xf32, #tpu.memory_space<smem>>
    %c27 = arith.constant 27 : index
    %35 = memref.load %arg3[%c27] : memref<98xf32, #tpu.memory_space<smem>>
    %c28 = arith.constant 28 : index
    %36 = memref.load %arg3[%c28] : memref<98xf32, #tpu.memory_space<smem>>
    %c29 = arith.constant 29 : index
    %37 = memref.load %arg3[%c29] : memref<98xf32, #tpu.memory_space<smem>>
    %c30 = arith.constant 30 : index
    %38 = memref.load %arg3[%c30] : memref<98xf32, #tpu.memory_space<smem>>
    %c31 = arith.constant 31 : index
    %39 = memref.load %arg3[%c31] : memref<98xf32, #tpu.memory_space<smem>>
    %c32 = arith.constant 32 : index
    %40 = memref.load %arg3[%c32] : memref<98xf32, #tpu.memory_space<smem>>
    %c33 = arith.constant 33 : index
    %41 = memref.load %arg3[%c33] : memref<98xf32, #tpu.memory_space<smem>>
    %c34 = arith.constant 34 : index
    %42 = memref.load %arg3[%c34] : memref<98xf32, #tpu.memory_space<smem>>
    %c35 = arith.constant 35 : index
    %43 = memref.load %arg3[%c35] : memref<98xf32, #tpu.memory_space<smem>>
    %c36 = arith.constant 36 : index
    %44 = memref.load %arg3[%c36] : memref<98xf32, #tpu.memory_space<smem>>
    %c37 = arith.constant 37 : index
    %45 = memref.load %arg3[%c37] : memref<98xf32, #tpu.memory_space<smem>>
    %c38 = arith.constant 38 : index
    %46 = memref.load %arg3[%c38] : memref<98xf32, #tpu.memory_space<smem>>
    %c39 = arith.constant 39 : index
    %47 = memref.load %arg3[%c39] : memref<98xf32, #tpu.memory_space<smem>>
    %c40 = arith.constant 40 : index
    %48 = memref.load %arg3[%c40] : memref<98xf32, #tpu.memory_space<smem>>
    %c41 = arith.constant 41 : index
    %49 = memref.load %arg3[%c41] : memref<98xf32, #tpu.memory_space<smem>>
    %c42 = arith.constant 42 : index
    %50 = memref.load %arg3[%c42] : memref<98xf32, #tpu.memory_space<smem>>
    %c43 = arith.constant 43 : index
    %51 = memref.load %arg3[%c43] : memref<98xf32, #tpu.memory_space<smem>>
    %c44 = arith.constant 44 : index
    %52 = memref.load %arg3[%c44] : memref<98xf32, #tpu.memory_space<smem>>
    %c45 = arith.constant 45 : index
    %53 = memref.load %arg3[%c45] : memref<98xf32, #tpu.memory_space<smem>>
    %c46 = arith.constant 46 : index
    %54 = memref.load %arg3[%c46] : memref<98xf32, #tpu.memory_space<smem>>
    %c47 = arith.constant 47 : index
    %55 = memref.load %arg3[%c47] : memref<98xf32, #tpu.memory_space<smem>>
    %c48 = arith.constant 48 : index
    %56 = memref.load %arg3[%c48] : memref<98xf32, #tpu.memory_space<smem>>
    %c49 = arith.constant 49 : index
    %57 = memref.load %arg3[%c49] : memref<98xf32, #tpu.memory_space<smem>>
    %c50 = arith.constant 50 : index
    %58 = memref.load %arg3[%c50] : memref<98xf32, #tpu.memory_space<smem>>
    %c51 = arith.constant 51 : index
    %59 = memref.load %arg3[%c51] : memref<98xf32, #tpu.memory_space<smem>>
    %c52 = arith.constant 52 : index
    %60 = memref.load %arg3[%c52] : memref<98xf32, #tpu.memory_space<smem>>
    %c53 = arith.constant 53 : index
    %61 = memref.load %arg3[%c53] : memref<98xf32, #tpu.memory_space<smem>>
    %c54 = arith.constant 54 : index
    %62 = memref.load %arg3[%c54] : memref<98xf32, #tpu.memory_space<smem>>
    %c55 = arith.constant 55 : index
    %63 = memref.load %arg3[%c55] : memref<98xf32, #tpu.memory_space<smem>>
    %c56 = arith.constant 56 : index
    %64 = memref.load %arg3[%c56] : memref<98xf32, #tpu.memory_space<smem>>
    %c57 = arith.constant 57 : index
    %65 = memref.load %arg3[%c57] : memref<98xf32, #tpu.memory_space<smem>>
    %c58 = arith.constant 58 : index
    %66 = memref.load %arg3[%c58] : memref<98xf32, #tpu.memory_space<smem>>
    %c59 = arith.constant 59 : index
    %67 = memref.load %arg3[%c59] : memref<98xf32, #tpu.memory_space<smem>>
    %c60 = arith.constant 60 : index
    %68 = memref.load %arg3[%c60] : memref<98xf32, #tpu.memory_space<smem>>
    %c61 = arith.constant 61 : index
    %69 = memref.load %arg3[%c61] : memref<98xf32, #tpu.memory_space<smem>>
    %c62 = arith.constant 62 : index
    %70 = memref.load %arg3[%c62] : memref<98xf32, #tpu.memory_space<smem>>
    %c63 = arith.constant 63 : index
    %71 = memref.load %arg3[%c63] : memref<98xf32, #tpu.memory_space<smem>>
    %c64 = arith.constant 64 : index
    %72 = memref.load %arg3[%c64] : memref<98xf32, #tpu.memory_space<smem>>
    %c65 = arith.constant 65 : index
    %73 = memref.load %arg3[%c65] : memref<98xf32, #tpu.memory_space<smem>>
    %c66 = arith.constant 66 : index
    %74 = memref.load %arg3[%c66] : memref<98xf32, #tpu.memory_space<smem>>
    %c67 = arith.constant 67 : index
    %75 = memref.load %arg3[%c67] : memref<98xf32, #tpu.memory_space<smem>>
    %c68 = arith.constant 68 : index
    %76 = memref.load %arg3[%c68] : memref<98xf32, #tpu.memory_space<smem>>
    %c69 = arith.constant 69 : index
    %77 = memref.load %arg3[%c69] : memref<98xf32, #tpu.memory_space<smem>>
    %c70 = arith.constant 70 : index
    %78 = memref.load %arg3[%c70] : memref<98xf32, #tpu.memory_space<smem>>
    %c71 = arith.constant 71 : index
    %79 = memref.load %arg3[%c71] : memref<98xf32, #tpu.memory_space<smem>>
    %c72 = arith.constant 72 : index
    %80 = memref.load %arg3[%c72] : memref<98xf32, #tpu.memory_space<smem>>
    %c73 = arith.constant 73 : index
    %81 = memref.load %arg3[%c73] : memref<98xf32, #tpu.memory_space<smem>>
    %c74 = arith.constant 74 : index
    %82 = memref.load %arg3[%c74] : memref<98xf32, #tpu.memory_space<smem>>
    %c75 = arith.constant 75 : index
    %83 = memref.load %arg3[%c75] : memref<98xf32, #tpu.memory_space<smem>>
    %c76 = arith.constant 76 : index
    %84 = memref.load %arg3[%c76] : memref<98xf32, #tpu.memory_space<smem>>
    %c77 = arith.constant 77 : index
    %85 = memref.load %arg3[%c77] : memref<98xf32, #tpu.memory_space<smem>>
    %c78 = arith.constant 78 : index
    %86 = memref.load %arg3[%c78] : memref<98xf32, #tpu.memory_space<smem>>
    %c79 = arith.constant 79 : index
    %87 = memref.load %arg3[%c79] : memref<98xf32, #tpu.memory_space<smem>>
    %c80 = arith.constant 80 : index
    %88 = memref.load %arg3[%c80] : memref<98xf32, #tpu.memory_space<smem>>
    %c81 = arith.constant 81 : index
    %89 = memref.load %arg3[%c81] : memref<98xf32, #tpu.memory_space<smem>>
    %c82 = arith.constant 82 : index
    %90 = memref.load %arg3[%c82] : memref<98xf32, #tpu.memory_space<smem>>
    %c83 = arith.constant 83 : index
    %91 = memref.load %arg3[%c83] : memref<98xf32, #tpu.memory_space<smem>>
    %c84 = arith.constant 84 : index
    %92 = memref.load %arg3[%c84] : memref<98xf32, #tpu.memory_space<smem>>
    %c85 = arith.constant 85 : index
    %93 = memref.load %arg3[%c85] : memref<98xf32, #tpu.memory_space<smem>>
    %c86 = arith.constant 86 : index
    %94 = memref.load %arg3[%c86] : memref<98xf32, #tpu.memory_space<smem>>
    %c87 = arith.constant 87 : index
    %95 = memref.load %arg3[%c87] : memref<98xf32, #tpu.memory_space<smem>>
    %c88 = arith.constant 88 : index
    %96 = memref.load %arg3[%c88] : memref<98xf32, #tpu.memory_space<smem>>
    %c89 = arith.constant 89 : index
    %97 = memref.load %arg3[%c89] : memref<98xf32, #tpu.memory_space<smem>>
    %c90 = arith.constant 90 : index
    %98 = memref.load %arg3[%c90] : memref<98xf32, #tpu.memory_space<smem>>
    %c91 = arith.constant 91 : index
    %99 = memref.load %arg3[%c91] : memref<98xf32, #tpu.memory_space<smem>>
    %c92 = arith.constant 92 : index
    %100 = memref.load %arg3[%c92] : memref<98xf32, #tpu.memory_space<smem>>
    %c93 = arith.constant 93 : index
    %101 = memref.load %arg3[%c93] : memref<98xf32, #tpu.memory_space<smem>>
    %c94 = arith.constant 94 : index
    %102 = memref.load %arg3[%c94] : memref<98xf32, #tpu.memory_space<smem>>
    %c95 = arith.constant 95 : index
    %103 = memref.load %arg3[%c95] : memref<98xf32, #tpu.memory_space<smem>>
    %c96 = arith.constant 96 : index
    %104 = memref.load %arg3[%c96] : memref<98xf32, #tpu.memory_space<smem>>
    %c97 = arith.constant 97 : index
    %105 = memref.load %arg3[%c97] : memref<98xf32, #tpu.memory_space<smem>>
    %c0_5 = arith.constant 0 : index
    %c0_6 = arith.constant 0 : index
    %106 = vector.load %arg2[%c0_5, %c0_6] : memref<1x256xi32, #tpu.memory_space<vmem>>, vector<1x256xi32>
    %c0_i32 = arith.constant 0 : i32
    %107 = arith.sitofp %c0_i32 : i32 to f32
    %108 = vector.broadcast %107 : f32 to vector<1x48xf32>
    %109 = tpu.concatenate %108, %5 in 1 : vector<1x48xf32>, vector<1x256xf32> -> vector<1x304xf32>
    %110 = vector.broadcast %107 : f32 to vector<1x48xf32>
    %111 = tpu.concatenate %109, %110 in 1 : vector<1x304xf32>, vector<1x48xf32> -> vector<1x352xf32>
    %c0_i32_7 = arith.constant 0 : i32
    %112 = arith.sitofp %c0_i32_7 : i32 to f32
    %113 = vector.broadcast %112 : f32 to vector<1x48xf32>
    %114 = tpu.concatenate %113, %7 in 1 : vector<1x48xf32>, vector<1x256xf32> -> vector<1x304xf32>
    %115 = vector.broadcast %112 : f32 to vector<1x48xf32>
    %116 = tpu.concatenate %114, %115 in 1 : vector<1x304xf32>, vector<1x48xf32> -> vector<1x352xf32>
    %117 = vector.extract_strided_slice %111 {offsets = [0, 0], sizes = [1, 256], strides = [1, 1]} : vector<1x352xf32> to vector<1x256xf32>
    %118 = vector.extract_strided_slice %111 {offsets = [0, 16], sizes = [1, 256], strides = [1, 1]} : vector<1x352xf32> to vector<1x256xf32>
    %119 = vector.extract_strided_slice %111 {offsets = [0, 32], sizes = [1, 256], strides = [1, 1]} : vector<1x352xf32> to vector<1x256xf32>
    %120 = vector.extract_strided_slice %111 {offsets = [0, 48], sizes = [1, 256], strides = [1, 1]} : vector<1x352xf32> to vector<1x256xf32>
    %121 = vector.extract_strided_slice %111 {offsets = [0, 64], sizes = [1, 256], strides = [1, 1]} : vector<1x352xf32> to vector<1x256xf32>
    %122 = vector.extract_strided_slice %111 {offsets = [0, 80], sizes = [1, 256], strides = [1, 1]} : vector<1x352xf32> to vector<1x256xf32>
    %123 = vector.extract_strided_slice %111 {offsets = [0, 96], sizes = [1, 256], strides = [1, 1]} : vector<1x352xf32> to vector<1x256xf32>
    %124 = vector.extract_strided_slice %116 {offsets = [0, 0], sizes = [1, 256], strides = [1, 1]} : vector<1x352xf32> to vector<1x256xf32>
    %125 = vector.extract_strided_slice %116 {offsets = [0, 16], sizes = [1, 256], strides = [1, 1]} : vector<1x352xf32> to vector<1x256xf32>
    %126 = vector.extract_strided_slice %116 {offsets = [0, 32], sizes = [1, 256], strides = [1, 1]} : vector<1x352xf32> to vector<1x256xf32>
    %127 = vector.extract_strided_slice %116 {offsets = [0, 48], sizes = [1, 256], strides = [1, 1]} : vector<1x352xf32> to vector<1x256xf32>
    %128 = vector.extract_strided_slice %116 {offsets = [0, 64], sizes = [1, 256], strides = [1, 1]} : vector<1x352xf32> to vector<1x256xf32>
    %129 = vector.extract_strided_slice %116 {offsets = [0, 80], sizes = [1, 256], strides = [1, 1]} : vector<1x352xf32> to vector<1x256xf32>
    %130 = vector.extract_strided_slice %116 {offsets = [0, 96], sizes = [1, 256], strides = [1, 1]} : vector<1x352xf32> to vector<1x256xf32>
    %cst_8 = arith.constant 0.000000e+00 : f32
    %131 = vector.broadcast %cst_8 : f32 to vector<1x256xf32>
    %cst_9 = arith.constant 0.000000e+00 : f32
    %132 = vector.broadcast %cst_9 : f32 to vector<1x256xf32>
    %133 = vector.broadcast %8 : f32 to vector<1x256xf32>
    %134 = arith.mulf %133, %117 : vector<1x256xf32>
    %135 = arith.addf %132, %134 : vector<1x256xf32>
    %136 = vector.broadcast %57 : f32 to vector<1x256xf32>
    %137 = arith.mulf %136, %124 : vector<1x256xf32>
    %138 = arith.addf %135, %137 : vector<1x256xf32>
    %139 = vector.broadcast %15 : f32 to vector<1x256xf32>
    %140 = arith.mulf %139, %118 : vector<1x256xf32>
    %141 = arith.addf %138, %140 : vector<1x256xf32>
    %142 = vector.broadcast %64 : f32 to vector<1x256xf32>
    %143 = arith.mulf %142, %125 : vector<1x256xf32>
    %144 = arith.addf %141, %143 : vector<1x256xf32>
    %145 = vector.broadcast %22 : f32 to vector<1x256xf32>
    %146 = arith.mulf %145, %119 : vector<1x256xf32>
    %147 = arith.addf %144, %146 : vector<1x256xf32>
    %148 = vector.broadcast %71 : f32 to vector<1x256xf32>
    %149 = arith.mulf %148, %126 : vector<1x256xf32>
    %150 = arith.addf %147, %149 : vector<1x256xf32>
    %151 = vector.broadcast %29 : f32 to vector<1x256xf32>
    %152 = arith.mulf %151, %120 : vector<1x256xf32>
    %153 = arith.addf %150, %152 : vector<1x256xf32>
    %154 = vector.broadcast %78 : f32 to vector<1x256xf32>
    %155 = arith.mulf %154, %127 : vector<1x256xf32>
    %156 = arith.addf %153, %155 : vector<1x256xf32>
    %157 = vector.broadcast %36 : f32 to vector<1x256xf32>
    %158 = arith.mulf %157, %121 : vector<1x256xf32>
    %159 = arith.addf %156, %158 : vector<1x256xf32>
    %160 = vector.broadcast %85 : f32 to vector<1x256xf32>
    %161 = arith.mulf %160, %128 : vector<1x256xf32>
    %162 = arith.addf %159, %161 : vector<1x256xf32>
    %163 = vector.broadcast %43 : f32 to vector<1x256xf32>
    %164 = arith.mulf %163, %122 : vector<1x256xf32>
    %165 = arith.addf %162, %164 : vector<1x256xf32>
    %166 = vector.broadcast %92 : f32 to vector<1x256xf32>
    %167 = arith.mulf %166, %129 : vector<1x256xf32>
    %168 = arith.addf %165, %167 : vector<1x256xf32>
    %169 = vector.broadcast %50 : f32 to vector<1x256xf32>
    %170 = arith.mulf %169, %123 : vector<1x256xf32>
    %171 = arith.addf %168, %170 : vector<1x256xf32>
    %172 = vector.broadcast %99 : f32 to vector<1x256xf32>
    %173 = arith.mulf %172, %130 : vector<1x256xf32>
    %174 = arith.addf %171, %173 : vector<1x256xf32>
    %c0_i32_10 = arith.constant 0 : i32
    %175 = arith.sitofp %c0_i32_10 : i32 to f32
    %176 = vector.broadcast %175 : f32 to vector<1x3xf32>
    %177 = tpu.concatenate %176, %174 in 1 : vector<1x3xf32>, vector<1x256xf32> -> vector<1x259xf32>
    %178 = vector.broadcast %175 : f32 to vector<1x3xf32>
    %179 = tpu.concatenate %177, %178 in 1 : vector<1x259xf32>, vector<1x3xf32> -> vector<1x262xf32>
    %180 = vector.extract_strided_slice %179 {offsets = [0, 0], sizes = [1, 256], strides = [1, 1]} : vector<1x262xf32> to vector<1x256xf32>
    %c3_i32 = arith.constant 3 : i32
    %181 = vector.broadcast %c3_i32 : i32 to vector<1x256xi32>
    %182 = arith.cmpi sge, %106, %181 : vector<1x256xi32>
    %cst_11 = arith.constant 0.000000e+00 : f32
    %183 = vector.broadcast %cst_11 : f32 to vector<1x256xf32>
    %184 = arith.select %182, %180, %183 : vector<1x256xi1>, vector<1x256xf32>
    %185 = arith.addf %131, %184 : vector<1x256xf32>
    %cst_12 = arith.constant 0.000000e+00 : f32
    %186 = vector.broadcast %cst_12 : f32 to vector<1x256xf32>
    %187 = vector.broadcast %9 : f32 to vector<1x256xf32>
    %188 = arith.mulf %187, %117 : vector<1x256xf32>
    %189 = arith.addf %186, %188 : vector<1x256xf32>
    %190 = vector.broadcast %58 : f32 to vector<1x256xf32>
    %191 = arith.mulf %190, %124 : vector<1x256xf32>
    %192 = arith.addf %189, %191 : vector<1x256xf32>
    %193 = vector.broadcast %16 : f32 to vector<1x256xf32>
    %194 = arith.mulf %193, %118 : vector<1x256xf32>
    %195 = arith.addf %192, %194 : vector<1x256xf32>
    %196 = vector.broadcast %65 : f32 to vector<1x256xf32>
    %197 = arith.mulf %196, %125 : vector<1x256xf32>
    %198 = arith.addf %195, %197 : vector<1x256xf32>
    %199 = vector.broadcast %23 : f32 to vector<1x256xf32>
    %200 = arith.mulf %199, %119 : vector<1x256xf32>
    %201 = arith.addf %198, %200 : vector<1x256xf32>
    %202 = vector.broadcast %72 : f32 to vector<1x256xf32>
    %203 = arith.mulf %202, %126 : vector<1x256xf32>
    %204 = arith.addf %201, %203 : vector<1x256xf32>
    %205 = vector.broadcast %30 : f32 to vector<1x256xf32>
    %206 = arith.mulf %205, %120 : vector<1x256xf32>
    %207 = arith.addf %204, %206 : vector<1x256xf32>
    %208 = vector.broadcast %79 : f32 to vector<1x256xf32>
    %209 = arith.mulf %208, %127 : vector<1x256xf32>
    %210 = arith.addf %207, %209 : vector<1x256xf32>
    %211 = vector.broadcast %37 : f32 to vector<1x256xf32>
    %212 = arith.mulf %211, %121 : vector<1x256xf32>
    %213 = arith.addf %210, %212 : vector<1x256xf32>
    %214 = vector.broadcast %86 : f32 to vector<1x256xf32>
    %215 = arith.mulf %214, %128 : vector<1x256xf32>
    %216 = arith.addf %213, %215 : vector<1x256xf32>
    %217 = vector.broadcast %44 : f32 to vector<1x256xf32>
    %218 = arith.mulf %217, %122 : vector<1x256xf32>
    %219 = arith.addf %216, %218 : vector<1x256xf32>
    %220 = vector.broadcast %93 : f32 to vector<1x256xf32>
    %221 = arith.mulf %220, %129 : vector<1x256xf32>
    %222 = arith.addf %219, %221 : vector<1x256xf32>
    %223 = vector.broadcast %51 : f32 to vector<1x256xf32>
    %224 = arith.mulf %223, %123 : vector<1x256xf32>
    %225 = arith.addf %222, %224 : vector<1x256xf32>
    %226 = vector.broadcast %100 : f32 to vector<1x256xf32>
    %227 = arith.mulf %226, %130 : vector<1x256xf32>
    %228 = arith.addf %225, %227 : vector<1x256xf32>
    %c0_i32_13 = arith.constant 0 : i32
    %229 = arith.sitofp %c0_i32_13 : i32 to f32
    %230 = vector.broadcast %229 : f32 to vector<1x3xf32>
    %231 = tpu.concatenate %230, %228 in 1 : vector<1x3xf32>, vector<1x256xf32> -> vector<1x259xf32>
    %232 = vector.broadcast %229 : f32 to vector<1x3xf32>
    %233 = tpu.concatenate %231, %232 in 1 : vector<1x259xf32>, vector<1x3xf32> -> vector<1x262xf32>
    %234 = vector.extract_strided_slice %233 {offsets = [0, 1], sizes = [1, 256], strides = [1, 1]} : vector<1x262xf32> to vector<1x256xf32>
    %c2_i32 = arith.constant 2 : i32
    %235 = vector.broadcast %c2_i32 : i32 to vector<1x256xi32>
    %236 = arith.cmpi sge, %106, %235 : vector<1x256xi32>
    %cst_14 = arith.constant 0.000000e+00 : f32
    %237 = vector.broadcast %cst_14 : f32 to vector<1x256xf32>
    %238 = arith.select %236, %234, %237 : vector<1x256xi1>, vector<1x256xf32>
    %239 = arith.addf %185, %238 : vector<1x256xf32>
    %cst_15 = arith.constant 0.000000e+00 : f32
    %240 = vector.broadcast %cst_15 : f32 to vector<1x256xf32>
    %241 = vector.broadcast %10 : f32 to vector<1x256xf32>
    %242 = arith.mulf %241, %117 : vector<1x256xf32>
    %243 = arith.addf %240, %242 : vector<1x256xf32>
    %244 = vector.broadcast %59 : f32 to vector<1x256xf32>
    %245 = arith.mulf %244, %124 : vector<1x256xf32>
    %246 = arith.addf %243, %245 : vector<1x256xf32>
    %247 = vector.broadcast %17 : f32 to vector<1x256xf32>
    %248 = arith.mulf %247, %118 : vector<1x256xf32>
    %249 = arith.addf %246, %248 : vector<1x256xf32>
    %250 = vector.broadcast %66 : f32 to vector<1x256xf32>
    %251 = arith.mulf %250, %125 : vector<1x256xf32>
    %252 = arith.addf %249, %251 : vector<1x256xf32>
    %253 = vector.broadcast %24 : f32 to vector<1x256xf32>
    %254 = arith.mulf %253, %119 : vector<1x256xf32>
    %255 = arith.addf %252, %254 : vector<1x256xf32>
    %256 = vector.broadcast %73 : f32 to vector<1x256xf32>
    %257 = arith.mulf %256, %126 : vector<1x256xf32>
    %258 = arith.addf %255, %257 : vector<1x256xf32>
    %259 = vector.broadcast %31 : f32 to vector<1x256xf32>
    %260 = arith.mulf %259, %120 : vector<1x256xf32>
    %261 = arith.addf %258, %260 : vector<1x256xf32>
    %262 = vector.broadcast %80 : f32 to vector<1x256xf32>
    %263 = arith.mulf %262, %127 : vector<1x256xf32>
    %264 = arith.addf %261, %263 : vector<1x256xf32>
    %265 = vector.broadcast %38 : f32 to vector<1x256xf32>
    %266 = arith.mulf %265, %121 : vector<1x256xf32>
    %267 = arith.addf %264, %266 : vector<1x256xf32>
    %268 = vector.broadcast %87 : f32 to vector<1x256xf32>
    %269 = arith.mulf %268, %128 : vector<1x256xf32>
    %270 = arith.addf %267, %269 : vector<1x256xf32>
    %271 = vector.broadcast %45 : f32 to vector<1x256xf32>
    %272 = arith.mulf %271, %122 : vector<1x256xf32>
    %273 = arith.addf %270, %272 : vector<1x256xf32>
    %274 = vector.broadcast %94 : f32 to vector<1x256xf32>
    %275 = arith.mulf %274, %129 : vector<1x256xf32>
    %276 = arith.addf %273, %275 : vector<1x256xf32>
    %277 = vector.broadcast %52 : f32 to vector<1x256xf32>
    %278 = arith.mulf %277, %123 : vector<1x256xf32>
    %279 = arith.addf %276, %278 : vector<1x256xf32>
    %280 = vector.broadcast %101 : f32 to vector<1x256xf32>
    %281 = arith.mulf %280, %130 : vector<1x256xf32>
    %282 = arith.addf %279, %281 : vector<1x256xf32>
    %c0_i32_16 = arith.constant 0 : i32
    %283 = arith.sitofp %c0_i32_16 : i32 to f32
    %284 = vector.broadcast %283 : f32 to vector<1x3xf32>
    %285 = tpu.concatenate %284, %282 in 1 : vector<1x3xf32>, vector<1x256xf32> -> vector<1x259xf32>
    %286 = vector.broadcast %283 : f32 to vector<1x3xf32>
    %287 = tpu.concatenate %285, %286 in 1 : vector<1x259xf32>, vector<1x3xf32> -> vector<1x262xf32>
    %288 = vector.extract_strided_slice %287 {offsets = [0, 2], sizes = [1, 256], strides = [1, 1]} : vector<1x262xf32> to vector<1x256xf32>
    %c1_i32 = arith.constant 1 : i32
    %289 = vector.broadcast %c1_i32 : i32 to vector<1x256xi32>
    %290 = arith.cmpi sge, %106, %289 : vector<1x256xi32>
    %cst_17 = arith.constant 0.000000e+00 : f32
    %291 = vector.broadcast %cst_17 : f32 to vector<1x256xf32>
    %292 = arith.select %290, %288, %291 : vector<1x256xi1>, vector<1x256xf32>
    %293 = arith.addf %239, %292 : vector<1x256xf32>
    %cst_18 = arith.constant 0.000000e+00 : f32
    %294 = vector.broadcast %cst_18 : f32 to vector<1x256xf32>
    %295 = vector.broadcast %11 : f32 to vector<1x256xf32>
    %296 = arith.mulf %295, %117 : vector<1x256xf32>
    %297 = arith.addf %294, %296 : vector<1x256xf32>
    %298 = vector.broadcast %60 : f32 to vector<1x256xf32>
    %299 = arith.mulf %298, %124 : vector<1x256xf32>
    %300 = arith.addf %297, %299 : vector<1x256xf32>
    %301 = vector.broadcast %18 : f32 to vector<1x256xf32>
    %302 = arith.mulf %301, %118 : vector<1x256xf32>
    %303 = arith.addf %300, %302 : vector<1x256xf32>
    %304 = vector.broadcast %67 : f32 to vector<1x256xf32>
    %305 = arith.mulf %304, %125 : vector<1x256xf32>
    %306 = arith.addf %303, %305 : vector<1x256xf32>
    %307 = vector.broadcast %25 : f32 to vector<1x256xf32>
    %308 = arith.mulf %307, %119 : vector<1x256xf32>
    %309 = arith.addf %306, %308 : vector<1x256xf32>
    %310 = vector.broadcast %74 : f32 to vector<1x256xf32>
    %311 = arith.mulf %310, %126 : vector<1x256xf32>
    %312 = arith.addf %309, %311 : vector<1x256xf32>
    %313 = vector.broadcast %32 : f32 to vector<1x256xf32>
    %314 = arith.mulf %313, %120 : vector<1x256xf32>
    %315 = arith.addf %312, %314 : vector<1x256xf32>
    %316 = vector.broadcast %81 : f32 to vector<1x256xf32>
    %317 = arith.mulf %316, %127 : vector<1x256xf32>
    %318 = arith.addf %315, %317 : vector<1x256xf32>
    %319 = vector.broadcast %39 : f32 to vector<1x256xf32>
    %320 = arith.mulf %319, %121 : vector<1x256xf32>
    %321 = arith.addf %318, %320 : vector<1x256xf32>
    %322 = vector.broadcast %88 : f32 to vector<1x256xf32>
    %323 = arith.mulf %322, %128 : vector<1x256xf32>
    %324 = arith.addf %321, %323 : vector<1x256xf32>
    %325 = vector.broadcast %46 : f32 to vector<1x256xf32>
    %326 = arith.mulf %325, %122 : vector<1x256xf32>
    %327 = arith.addf %324, %326 : vector<1x256xf32>
    %328 = vector.broadcast %95 : f32 to vector<1x256xf32>
    %329 = arith.mulf %328, %129 : vector<1x256xf32>
    %330 = arith.addf %327, %329 : vector<1x256xf32>
    %331 = vector.broadcast %53 : f32 to vector<1x256xf32>
    %332 = arith.mulf %331, %123 : vector<1x256xf32>
    %333 = arith.addf %330, %332 : vector<1x256xf32>
    %334 = vector.broadcast %102 : f32 to vector<1x256xf32>
    %335 = arith.mulf %334, %130 : vector<1x256xf32>
    %336 = arith.addf %333, %335 : vector<1x256xf32>
    %337 = arith.addf %293, %336 : vector<1x256xf32>
    %cst_19 = arith.constant 0.000000e+00 : f32
    %338 = vector.broadcast %cst_19 : f32 to vector<1x256xf32>
    %339 = vector.broadcast %12 : f32 to vector<1x256xf32>
    %340 = arith.mulf %339, %117 : vector<1x256xf32>
    %341 = arith.addf %338, %340 : vector<1x256xf32>
    %342 = vector.broadcast %61 : f32 to vector<1x256xf32>
    %343 = arith.mulf %342, %124 : vector<1x256xf32>
    %344 = arith.addf %341, %343 : vector<1x256xf32>
    %345 = vector.broadcast %19 : f32 to vector<1x256xf32>
    %346 = arith.mulf %345, %118 : vector<1x256xf32>
    %347 = arith.addf %344, %346 : vector<1x256xf32>
    %348 = vector.broadcast %68 : f32 to vector<1x256xf32>
    %349 = arith.mulf %348, %125 : vector<1x256xf32>
    %350 = arith.addf %347, %349 : vector<1x256xf32>
    %351 = vector.broadcast %26 : f32 to vector<1x256xf32>
    %352 = arith.mulf %351, %119 : vector<1x256xf32>
    %353 = arith.addf %350, %352 : vector<1x256xf32>
    %354 = vector.broadcast %75 : f32 to vector<1x256xf32>
    %355 = arith.mulf %354, %126 : vector<1x256xf32>
    %356 = arith.addf %353, %355 : vector<1x256xf32>
    %357 = vector.broadcast %33 : f32 to vector<1x256xf32>
    %358 = arith.mulf %357, %120 : vector<1x256xf32>
    %359 = arith.addf %356, %358 : vector<1x256xf32>
    %360 = vector.broadcast %82 : f32 to vector<1x256xf32>
    %361 = arith.mulf %360, %127 : vector<1x256xf32>
    %362 = arith.addf %359, %361 : vector<1x256xf32>
    %363 = vector.broadcast %40 : f32 to vector<1x256xf32>
    %364 = arith.mulf %363, %121 : vector<1x256xf32>
    %365 = arith.addf %362, %364 : vector<1x256xf32>
    %366 = vector.broadcast %89 : f32 to vector<1x256xf32>
    %367 = arith.mulf %366, %128 : vector<1x256xf32>
    %368 = arith.addf %365, %367 : vector<1x256xf32>
    %369 = vector.broadcast %47 : f32 to vector<1x256xf32>
    %370 = arith.mulf %369, %122 : vector<1x256xf32>
    %371 = arith.addf %368, %370 : vector<1x256xf32>
    %372 = vector.broadcast %96 : f32 to vector<1x256xf32>
    %373 = arith.mulf %372, %129 : vector<1x256xf32>
    %374 = arith.addf %371, %373 : vector<1x256xf32>
    %375 = vector.broadcast %54 : f32 to vector<1x256xf32>
    %376 = arith.mulf %375, %123 : vector<1x256xf32>
    %377 = arith.addf %374, %376 : vector<1x256xf32>
    %378 = vector.broadcast %103 : f32 to vector<1x256xf32>
    %379 = arith.mulf %378, %130 : vector<1x256xf32>
    %380 = arith.addf %377, %379 : vector<1x256xf32>
    %c0_i32_20 = arith.constant 0 : i32
    %381 = arith.sitofp %c0_i32_20 : i32 to f32
    %382 = vector.broadcast %381 : f32 to vector<1x3xf32>
    %383 = tpu.concatenate %382, %380 in 1 : vector<1x3xf32>, vector<1x256xf32> -> vector<1x259xf32>
    %384 = vector.broadcast %381 : f32 to vector<1x3xf32>
    %385 = tpu.concatenate %383, %384 in 1 : vector<1x259xf32>, vector<1x3xf32> -> vector<1x262xf32>
    %386 = vector.extract_strided_slice %385 {offsets = [0, 4], sizes = [1, 256], strides = [1, 1]} : vector<1x262xf32> to vector<1x256xf32>
    %c15_i32 = arith.constant 15 : i32
    %387 = vector.broadcast %c15_i32 : i32 to vector<1x256xi32>
    %388 = arith.cmpi slt, %106, %387 : vector<1x256xi32>
    %cst_21 = arith.constant 0.000000e+00 : f32
    %389 = vector.broadcast %cst_21 : f32 to vector<1x256xf32>
    %390 = arith.select %388, %386, %389 : vector<1x256xi1>, vector<1x256xf32>
    %391 = arith.addf %337, %390 : vector<1x256xf32>
    %cst_22 = arith.constant 0.000000e+00 : f32
    %392 = vector.broadcast %cst_22 : f32 to vector<1x256xf32>
    %393 = vector.broadcast %13 : f32 to vector<1x256xf32>
    %394 = arith.mulf %393, %117 : vector<1x256xf32>
    %395 = arith.addf %392, %394 : vector<1x256xf32>
    %396 = vector.broadcast %62 : f32 to vector<1x256xf32>
    %397 = arith.mulf %396, %124 : vector<1x256xf32>
    %398 = arith.addf %395, %397 : vector<1x256xf32>
    %399 = vector.broadcast %20 : f32 to vector<1x256xf32>
    %400 = arith.mulf %399, %118 : vector<1x256xf32>
    %401 = arith.addf %398, %400 : vector<1x256xf32>
    %402 = vector.broadcast %69 : f32 to vector<1x256xf32>
    %403 = arith.mulf %402, %125 : vector<1x256xf32>
    %404 = arith.addf %401, %403 : vector<1x256xf32>
    %405 = vector.broadcast %27 : f32 to vector<1x256xf32>
    %406 = arith.mulf %405, %119 : vector<1x256xf32>
    %407 = arith.addf %404, %406 : vector<1x256xf32>
    %408 = vector.broadcast %76 : f32 to vector<1x256xf32>
    %409 = arith.mulf %408, %126 : vector<1x256xf32>
    %410 = arith.addf %407, %409 : vector<1x256xf32>
    %411 = vector.broadcast %34 : f32 to vector<1x256xf32>
    %412 = arith.mulf %411, %120 : vector<1x256xf32>
    %413 = arith.addf %410, %412 : vector<1x256xf32>
    %414 = vector.broadcast %83 : f32 to vector<1x256xf32>
    %415 = arith.mulf %414, %127 : vector<1x256xf32>
    %416 = arith.addf %413, %415 : vector<1x256xf32>
    %417 = vector.broadcast %41 : f32 to vector<1x256xf32>
    %418 = arith.mulf %417, %121 : vector<1x256xf32>
    %419 = arith.addf %416, %418 : vector<1x256xf32>
    %420 = vector.broadcast %90 : f32 to vector<1x256xf32>
    %421 = arith.mulf %420, %128 : vector<1x256xf32>
    %422 = arith.addf %419, %421 : vector<1x256xf32>
    %423 = vector.broadcast %48 : f32 to vector<1x256xf32>
    %424 = arith.mulf %423, %122 : vector<1x256xf32>
    %425 = arith.addf %422, %424 : vector<1x256xf32>
    %426 = vector.broadcast %97 : f32 to vector<1x256xf32>
    %427 = arith.mulf %426, %129 : vector<1x256xf32>
    %428 = arith.addf %425, %427 : vector<1x256xf32>
    %429 = vector.broadcast %55 : f32 to vector<1x256xf32>
    %430 = arith.mulf %429, %123 : vector<1x256xf32>
    %431 = arith.addf %428, %430 : vector<1x256xf32>
    %432 = vector.broadcast %104 : f32 to vector<1x256xf32>
    %433 = arith.mulf %432, %130 : vector<1x256xf32>
    %434 = arith.addf %431, %433 : vector<1x256xf32>
    %c0_i32_23 = arith.constant 0 : i32
    %435 = arith.sitofp %c0_i32_23 : i32 to f32
    %436 = vector.broadcast %435 : f32 to vector<1x3xf32>
    %437 = tpu.concatenate %436, %434 in 1 : vector<1x3xf32>, vector<1x256xf32> -> vector<1x259xf32>
    %438 = vector.broadcast %435 : f32 to vector<1x3xf32>
    %439 = tpu.concatenate %437, %438 in 1 : vector<1x259xf32>, vector<1x3xf32> -> vector<1x262xf32>
    %440 = vector.extract_strided_slice %439 {offsets = [0, 5], sizes = [1, 256], strides = [1, 1]} : vector<1x262xf32> to vector<1x256xf32>
    %c14_i32 = arith.constant 14 : i32
    %441 = vector.broadcast %c14_i32 : i32 to vector<1x256xi32>
    %442 = arith.cmpi slt, %106, %441 : vector<1x256xi32>
    %cst_24 = arith.constant 0.000000e+00 : f32
    %443 = vector.broadcast %cst_24 : f32 to vector<1x256xf32>
    %444 = arith.select %442, %440, %443 : vector<1x256xi1>, vector<1x256xf32>
    %445 = arith.addf %391, %444 : vector<1x256xf32>
    %cst_25 = arith.constant 0.000000e+00 : f32
    %446 = vector.broadcast %cst_25 : f32 to vector<1x256xf32>
    %447 = vector.broadcast %14 : f32 to vector<1x256xf32>
    %448 = arith.mulf %447, %117 : vector<1x256xf32>
    %449 = arith.addf %446, %448 : vector<1x256xf32>
    %450 = vector.broadcast %63 : f32 to vector<1x256xf32>
    %451 = arith.mulf %450, %124 : vector<1x256xf32>
    %452 = arith.addf %449, %451 : vector<1x256xf32>
    %453 = vector.broadcast %21 : f32 to vector<1x256xf32>
    %454 = arith.mulf %453, %118 : vector<1x256xf32>
    %455 = arith.addf %452, %454 : vector<1x256xf32>
    %456 = vector.broadcast %70 : f32 to vector<1x256xf32>
    %457 = arith.mulf %456, %125 : vector<1x256xf32>
    %458 = arith.addf %455, %457 : vector<1x256xf32>
    %459 = vector.broadcast %28 : f32 to vector<1x256xf32>
    %460 = arith.mulf %459, %119 : vector<1x256xf32>
    %461 = arith.addf %458, %460 : vector<1x256xf32>
    %462 = vector.broadcast %77 : f32 to vector<1x256xf32>
    %463 = arith.mulf %462, %126 : vector<1x256xf32>
    %464 = arith.addf %461, %463 : vector<1x256xf32>
    %465 = vector.broadcast %35 : f32 to vector<1x256xf32>
    %466 = arith.mulf %465, %120 : vector<1x256xf32>
    %467 = arith.addf %464, %466 : vector<1x256xf32>
    %468 = vector.broadcast %84 : f32 to vector<1x256xf32>
    %469 = arith.mulf %468, %127 : vector<1x256xf32>
    %470 = arith.addf %467, %469 : vector<1x256xf32>
    %471 = vector.broadcast %42 : f32 to vector<1x256xf32>
    %472 = arith.mulf %471, %121 : vector<1x256xf32>
    %473 = arith.addf %470, %472 : vector<1x256xf32>
    %474 = vector.broadcast %91 : f32 to vector<1x256xf32>
    %475 = arith.mulf %474, %128 : vector<1x256xf32>
    %476 = arith.addf %473, %475 : vector<1x256xf32>
    %477 = vector.broadcast %49 : f32 to vector<1x256xf32>
    %478 = arith.mulf %477, %122 : vector<1x256xf32>
    %479 = arith.addf %476, %478 : vector<1x256xf32>
    %480 = vector.broadcast %98 : f32 to vector<1x256xf32>
    %481 = arith.mulf %480, %129 : vector<1x256xf32>
    %482 = arith.addf %479, %481 : vector<1x256xf32>
    %483 = vector.broadcast %56 : f32 to vector<1x256xf32>
    %484 = arith.mulf %483, %123 : vector<1x256xf32>
    %485 = arith.addf %482, %484 : vector<1x256xf32>
    %486 = vector.broadcast %105 : f32 to vector<1x256xf32>
    %487 = arith.mulf %486, %130 : vector<1x256xf32>
    %488 = arith.addf %485, %487 : vector<1x256xf32>
    %c0_i32_26 = arith.constant 0 : i32
    %489 = arith.sitofp %c0_i32_26 : i32 to f32
    %490 = vector.broadcast %489 : f32 to vector<1x3xf32>
    %491 = tpu.concatenate %490, %488 in 1 : vector<1x3xf32>, vector<1x256xf32> -> vector<1x259xf32>
    %492 = vector.broadcast %489 : f32 to vector<1x3xf32>
    %493 = tpu.concatenate %491, %492 in 1 : vector<1x259xf32>, vector<1x3xf32> -> vector<1x262xf32>
    %494 = vector.extract_strided_slice %493 {offsets = [0, 6], sizes = [1, 256], strides = [1, 1]} : vector<1x262xf32> to vector<1x256xf32>
    %c13_i32 = arith.constant 13 : i32
    %495 = vector.broadcast %c13_i32 : i32 to vector<1x256xi32>
    %496 = arith.cmpi slt, %106, %495 : vector<1x256xi32>
    %cst_27 = arith.constant 0.000000e+00 : f32
    %497 = vector.broadcast %cst_27 : f32 to vector<1x256xf32>
    %498 = arith.select %496, %494, %497 : vector<1x256xi1>, vector<1x256xf32>
    %499 = arith.addf %445, %498 : vector<1x256xf32>
    %500 = arith.negf %499 : vector<1x256xf32>
    %501 = math.exp %500 : vector<1x256xf32>
    %cst_28 = arith.constant 1.000000e+00 : f32
    %502 = vector.broadcast %cst_28 : f32 to vector<1x256xf32>
    %503 = arith.addf %502, %501 : vector<1x256xf32>
    %504 = arith.divf %502, %503 : vector<1x256xf32>
    %505 = vector.broadcast %504 : vector<1x256xf32> to vector<4x256xf32>
    %506 = arith.mulf %1, %505 : vector<4x256xf32>
    %c0_29 = arith.constant 0 : index
    %c0_30 = arith.constant 0 : index
    %c0_31 = arith.constant 0 : index
    %507 = vector.load %arg4[%c0_29, %c0_30, %c0_31] : memref<1x4x256xf32, #tpu.memory_space<vmem>>, vector<1x4x256xf32>
    %508 = vector.shape_cast %507 : vector<1x4x256xf32> to vector<4x256xf32>
    %509 = vector.shape_cast %506 : vector<4x256xf32> to vector<1x4x256xf32>
    tpu.vector_store %arg4[%c0_29, %c0_30, %c0_31], %509 {strides = array<i32>} : memref<1x4x256xf32, #tpu.memory_space<vmem>>, vector<1x4x256xf32>,
    return
  }
  func.func @transform_0(%arg0: i32) -> (i32, i32, i32) {
    %c0_i32 = arith.constant 0 : i32
    %c0_i32_0 = arith.constant 0 : i32
    %c0_i32_1 = arith.constant 0 : i32
    return %arg0, %c0_i32, %c0_i32_0 : i32, i32, i32
  }
  func.func @transform_1(%arg0: i32) -> (i32, i32) {
    %c0_i32 = arith.constant 0 : i32
    %c0_i32_0 = arith.constant 0 : i32
    %c0_i32_1 = arith.constant 0 : i32
    return %c0_i32, %c0_i32_0 : i32, i32
  }
  func.func @transform_2(%arg0: i32) -> i32 {
    %c0_i32 = arith.constant 0 : i32
    %c0_i32_0 = arith.constant 0 : i32
    return %c0_i32 : i32
  }
  func.func @transform_3(%arg0: i32) -> (i32, i32, i32) {
    %c0_i32 = arith.constant 0 : i32
    %c0_i32_0 = arith.constant 0 : i32
    %c0_i32_1 = arith.constant 0 : i32
    return %arg0, %c0_i32, %c0_i32_0 : i32, i32, i32
  }
}

</mosaic_0001>

<llo_original>
// kernel: tpu_custom_call.1
$region0: #{tpu_custom_call.1}
  #allocation0 [shape = 'u32[]', space=smem, size = 0x4, offset = 0x4, fixed_abs, tag = 'smem constant byte address 0x4 - core index']
  #allocation1 [shape = 'u32[144,128]{1,0:T(1,128)}', space=vmem, size = 0x12000, scoped, tag = 'internal scratch']
  %s0 = inlined_call_operand.hbm [shape: f32[2,4,256], index: 0, kind: input, shape index: {}]
  %s1 = inlined_call_operand.vmem [shape: s32[1,256], index: 1, kind: input, shape index: {}]
  %s2 = inlined_call_operand.vmem [shape: f32[98], index: 2, kind: input, shape index: {}]
  %s3 = inlined_call_operand.hbm [shape: f32[2,4,256], index: 3, kind: output, shape index: {}]
  %s4 = sld [smem:[#allocation0]]
  $region53: #{tpu_custom_call.1} parent=0
    _
  %s6 = ssub.s32 1, %s4
  %s7 = scalar_select 0, %s6, %s4
  $region1: #{tpu_custom_call.1} parent=0
    #allocation2 [shape = 'u8[8192]{0}', space=vmem, size = 0x2000, scoped, tag = 'input window, operand 0']
    #allocation3 [shape = 's32[2]{0}', space=sflag, size = 0x8, scoped, tag = 'scoped memory for tpu_custom_call.1']
    #allocation4 [shape = 's32[2]{0}', space=sflag, size = 0x8, scoped, tag = 'scoped memory for tpu_custom_call.1']
    #allocation5 [shape = 's32[2]{0}', space=sflag, size = 0x8, scoped, tag = 'scoped memory for tpu_custom_call.1']
    #allocation6 [shape = 'u8[512]{0}', space=smem, size = 0x200, scoped, tag = 'input window, operand 2, single buffered']
    #allocation7 [shape = 'u8[8192]{0}', space=vmem, size = 0x2000, scoped, tag = 'output window, operand 0']
    %8 = vsyncpa [#allocation3], 0
    %s9 = scalar_lea.sflag [#allocation3], 1
    %10 = vsyncpa %s9, 0
    %11 = vsyncpa [#allocation5], 0
    %12 = vsyncpa [#allocation4], 0
    %s13 = scalar_lea.sflag [#allocation4], 1
    %14 = vsyncpa %s13, 0
    loop: start=0, step=1, limit=4
    $region2: #{tpu_custom_call.1} parent=1 // loop_pre_header
      _
    $region3: #{tpu_custom_call.1} parent=1 // loop_header
      %s16 = sphi 0, %s20
      %p17 = scmp.ge.s32.totalorder %s16, 4
      %s26 = sphi 0, %s28
      %s29 = sphi 0, %s26
      %s30 = sphi 0, %s29
      %s46 = sphi 0, %s30
      %s50 = sphi 0, %s50
      %s52 = sphi 0, %s50
      %s53 = sphi 0, %s52
      %s67 = sphi 0, %s53
      %s71 = sphi 0, %s71
      %s73 = sphi 0, %s71
      %s74 = sphi 0, %s73
      %s88 = sphi 0, %s74
      %s94 = sphi 0, %s96
      %s97 = sphi 0, %s94
      %s98 = sphi 0, %s97
      %s114 = sphi 0, %s98
    $region4: #{tpu_custom_call.1} parent=1 // loop_header_branch
      %19 = sbr.rel (%p17) target = $region8
    $region5: #{tpu_custom_call.1} parent=1 // loop_body
      %s21 = ssub.s32 %s16, 1
      %s22 = ssub.s32 %s16, 2
      %s23 = sadd.s32 %s16, 1
      %s24 = ssub.s32 %s16, %s23
      %p25 = scmp.eq.s32.totalorder %s24, 0
      %s27 = sadd.s32 %s26, 1
      %s28 = scalar_select %p25, %s26, %s27
      %p31 = pneg %p25
      %p32 = scmp.eq.s32.totalorder %s16, 1
      %p33 = por %p31, %p32
      %p34 = scmp.ne.s32.totalorder %s26, %s29
      %p35 = scmp.eq.s32.totalorder %s16, 0
      %p36 = por %p34, %p35
      %p37 = scmp.ne.s32.totalorder %s26, %s29
      %p38 = scmp.eq.s32.totalorder %s21, 1
      %p39 = por %p37, %p38
      %p40 = scmp.ne.s32.totalorder %s29, %s30
      %p41 = scmp.eq.s32.totalorder %s21, 0
      %p42 = por %p40, %p41
      %p43 = scmp.ne.s32.totalorder %s29, %s30
      %p44 = scmp.eq.s32.totalorder %s22, 1
      %p45 = por %p43, %p44
      %p47 = scmp.ne.s32.totalorder %s30, %s46
      %p48 = scmp.eq.s32.totalorder %s22, 0
      %p49 = por %p47, %p48
      %s51 = sadd.s32 %s50, 1
      %p54 = scmp.eq.s32.totalorder %s16, 1
      %p55 = scmp.ne.s32.totalorder %s50, %s52
      %p56 = scmp.eq.s32.totalorder %s16, 0
      %p57 = por %p55, %p56
      %p58 = scmp.ne.s32.totalorder %s50, %s52
      %p59 = scmp.eq.s32.totalorder %s21, 1
      %p60 = por %p58, %p59
      %p61 = scmp.ne.s32.totalorder %s52, %s53
      %p62 = scmp.eq.s32.totalorder %s21, 0
      %p63 = por %p61, %p62
      %p64 = scmp.ne.s32.totalorder %s52, %s53
      %p65 = scmp.eq.s32.totalorder %s22, 1
      %p66 = por %p64, %p65
      %p68 = scmp.ne.s32.totalorder %s53, %s67
      %p69 = scmp.eq.s32.totalorder %s22, 0
      %p70 = por %p68, %p69
      %s72 = sadd.s32 %s71, 1
      %p75 = scmp.eq.s32.totalorder %s16, 1
      %p76 = scmp.ne.s32.totalorder %s71, %s73
      %p77 = scmp.eq.s32.totalorder %s16, 0
      %p78 = por %p76, %p77
      %p79 = scmp.ne.s32.totalorder %s71, %s73
      %p80 = scmp.eq.s32.totalorder %s21, 1
      %p81 = por %p79, %p80
      %p82 = scmp.ne.s32.totalorder %s73, %s74
      %p83 = scmp.eq.s32.totalorder %s21, 0
      %p84 = por %p82, %p83
      %p85 = scmp.ne.s32.totalorder %s73, %s74
      %p86 = scmp.eq.s32.totalorder %s22, 1
      %p87 = por %p85, %p86
      %p89 = scmp.ne.s32.totalorder %s74, %s88
      %p90 = scmp.eq.s32.totalorder %s22, 0
      %p91 = por %p89, %p90
      %s92 = ssub.s32 %s16, %s23
      %p93 = scmp.eq.s32.totalorder %s92, 0
      %s95 = sadd.s32 %s94, 1
      %s96 = scalar_select %p93, %s94, %s95
      %p99 = pneg %p93
      %p100 = scmp.eq.s32.totalorder %s16, 1
      %p101 = por %p99, %p100
      %p102 = scmp.ne.s32.totalorder %s94, %s97
      %p103 = scmp.eq.s32.totalorder %s16, 0
      %p104 = por %p102, %p103
      %p105 = scmp.ne.s32.totalorder %s94, %s97
      %p106 = scmp.eq.s32.totalorder %s21, 1
      %p107 = por %p105, %p106
      %p108 = scmp.ne.s32.totalorder %s97, %s98
      %p109 = scmp.eq.s32.totalorder %s21, 0
      %p110 = por %p108, %p109
      %p111 = scmp.ne.s32.totalorder %s97, %s98
      %p112 = scmp.eq.s32.totalorder %s22, 1
      %p113 = por %p111, %p112
      %p115 = scmp.ne.s32.totalorder %s98, %s114
      %p116 = scmp.eq.s32.totalorder %s22, 0
      %p117 = por %p115, %p116
      %p118 = scmp.le.s32.totalorder 1, %s16
      %p119 = scmp.lt.s32.totalorder %s16, 3
      %p120 = pnand %p118, %p119
      %p121 = pneg %p120
      // Predicated region
      $region9: #{tpu_custom_call.1} parent=5 // pred_check
        _
      $region10: #{tpu_custom_call.1} parent=5 // pred_check_branch
        %123 = sbr.rel (%p120) target = $region12
      $region11: #{tpu_custom_call.1} parent=5 // pred_region
        %s124 = ssub.s32 %s16, 1
        // Predicated region
        $region13: #{tpu_custom_call.1} parent=11 // pred_check
          %p125 = pneg %p63
        $region14: #{tpu_custom_call.1} parent=11 // pred_check_branch
          %127 = sbr.rel (%p125) target = $region16
        $region15: #{tpu_custom_call.1} parent=11 // pred_region
          _
        $region16: #{tpu_custom_call.1} parent=11 // pred_fallthru
          _
        // Predicated region
        $region17: #{tpu_custom_call.1} parent=11 // pred_check
          %p128 = pneg %p84
        $region18: #{tpu_custom_call.1} parent=11 // pred_check_branch
          %130 = sbr.rel (%p128) target = $region20
        $region19: #{tpu_custom_call.1} parent=11 // pred_region
          %s132 = ssub.s32 16, 16
          %133 = vsyncadd [#allocation5], %s132
          %s135 = sshll.u32 %s2, 4
          %s136 = int_to_ptr.vmem [resolvable:$true] %s135
          %138 = dma.vmem_to_smem %s136, 16, [#allocation6], [#allocation5]
        $region20: #{tpu_custom_call.1} parent=11 // pred_fallthru
          _
      $region12: #{tpu_custom_call.1} parent=5 // pred_fallthru
        _
      %p139 = scmp.lt.s32.totalorder %s16, 2
      // Predicated region
      $region21: #{tpu_custom_call.1} parent=5 // pred_check
        %p140 = pneg %p139
      $region22: #{tpu_custom_call.1} parent=5 // pred_check_branch
        %142 = sbr.rel (%p140) target = $region24
      $region23: #{tpu_custom_call.1} parent=5 // pred_region
        // Predicated region
        $region25: #{tpu_custom_call.1} parent=23 // pred_check
          %p143 = pneg %p36
        $region26: #{tpu_custom_call.1} parent=23 // pred_check_branch
          %145 = sbr.rel (%p143) target = $region28
        $region27: #{tpu_custom_call.1} parent=23 // pred_region
          %s146 = sand.u32 %s26, 1
          %s147 = scalar_lea.sflag [#allocation3], %s146
          %s148 = sand.u32 %s26, 1
          %s149 = smul.addr %s148, 8
          %s150 = scalar_lea.vmem [#allocation2], %s149
          %s152 = ssub.s32 128, 128
          %153 = vsyncadd %s147, %s152
          %s154 = smul.addr %s16, 2
          %s155 = smul.addr %s154, 64
          %s156 = scalar_lea.hbm %s0, %s155
          %s158 = sshll.u32 %s150, 4
          %s159 = int_to_ptr.vmem [resolvable:$true] %s158
          %161 = dma.hbm_to_vmem [thread:$0]  %s156, 128, %s159, %s147
        $region28: #{tpu_custom_call.1} parent=23 // pred_fallthru
          _
      $region24: #{tpu_custom_call.1} parent=5 // pred_fallthru
        _
      %p162 = scmp.le.s32.totalorder 1, %s16
      %p163 = scmp.lt.s32.totalorder %s16, 3
      %p164 = pnand %p162, %p163
      %p165 = pneg %p164
      // Predicated region
      $region29: #{tpu_custom_call.1} parent=5 // pred_check
        _
      $region30: #{tpu_custom_call.1} parent=5 // pred_check_branch
        %167 = sbr.rel (%p164) target = $region32
      $region31: #{tpu_custom_call.1} parent=5 // pred_region
        %s168 = ssub.s32 %s16, 1
        %s169 = sand.u32 %s29, 1
        %s170 = scalar_lea.sflag [#allocation3], %s169
        %s171 = sand.u32 %s29, 1
        %s172 = smul.addr %s171, 8
        %s173 = scalar_lea.vmem [#allocation2], %s172
        // Predicated region
        $region33: #{tpu_custom_call.1} parent=31 // pred_check
          %p174 = pneg %p42
        $region34: #{tpu_custom_call.1} parent=31 // pred_check_branch
          %176 = sbr.rel (%p174) target = $region36
        $region35: #{tpu_custom_call.1} parent=31 // pred_region
          %177 = dma.done %s170, 128
        $region36: #{tpu_custom_call.1} parent=31 // pred_fallthru
          _
        // Predicated region
        $region37: #{tpu_custom_call.1} parent=31 // pred_check
          %p178 = pneg %p84
        $region38: #{tpu_custom_call.1} parent=31 // pred_check_branch
          %180 = sbr.rel (%p178) target = $region40
        $region39: #{tpu_custom_call.1} parent=31 // pred_region
          %181 = dma.done [#allocation5], 16
        $region40: #{tpu_custom_call.1} parent=31 // pred_fallthru
          _
        %182 = sfence
        %s183 = sand.u32 %s29, 1
        %s184 = scalar_lea.sflag [#allocation3], %s183
        %s185 = sand.u32 %s29, 1
        %s186 = smul.addr %s185, 8
        %s187 = scalar_lea.vmem [#allocation2], %s186
        %p188 = pneg %p42
        %p189 = pneg %p39
        %p190 = pneg %p63
        %p191 = pneg %p60
        %p192 = pneg %p84
        %p193 = pneg %p81
        %p194 = pneg %p110
        %p195 = pneg %p107
        %s196 = sand.u32 %s97, 1
        %s197 = scalar_lea.sflag [#allocation4], %s196
        %s198 = sand.u32 %s97, 1
        %s199 = smul.addr %s198, 8
        %s200 = scalar_lea.vmem [#allocation7], %s199
        %v201 = vld [vmem:[%s173] sm:$0xff]
        %v203 = vcombine.high %v201, %v201
        %vm205 = vcmask 1043456
        %v206 = vsel %vm205, %v201, 0.0
        %v207 = vrot.slane %v206, 4
        %v208 = vadd.f32 %v206, %v207
        %v209 = vrot.slane %v208, 2
        %v210 = vadd.f32 %v208, %v209
        %v211 = vrot.slane %v210, 1
        %v212 = vadd.f32 %v210, %v211
        %v213 = vsel %vm205, %v203, 0.0
        %v214 = vrot.slane %v213, 4
        %v215 = vadd.f32 %v213, %v214
        %v216 = vrot.slane %v215, 2
        %v217 = vadd.f32 %v215, %v216
        %v218 = vrot.slane %v217, 1
        %v219 = vadd.f32 %v217, %v218
        %v220 = vmul.f32 %v212, 0.25
        %v221 = vmul.f32 %v219, 0.25
        %v222 = vsel %vm205, %v201, -inf
        %v223 = vrot.slane %v222, 4
        %v224 = vmax.f32 %v222, %v223
        %v225 = vrot.slane %v224, 2
        %v226 = vmax.f32 %v224, %v225
        %v227 = vrot.slane %v226, 1
        %v228 = vmax.f32 %v226, %v227
        %v229 = vsel %vm205, %v203, -inf
        %v230 = vrot.slane %v229, 4
        %v231 = vmax.f32 %v229, %v230
        %v232 = vrot.slane %v231, 2
        %v233 = vmax.f32 %v231, %v232
        %v234 = vrot.slane %v233, 1
        %v235 = vmax.f32 %v233, %v234
        %s236 = sld [smem:[#allocation6]]
        %s237 = sld [smem:[#allocation6 + $0x1]]
        %s238 = sld [smem:[#allocation6 + $0x2]]
        %s239 = sld [smem:[#allocation6 + $0x3]]
        %s240 = sld [smem:[#allocation6 + $0x4]]
        %s241 = sld [smem:[#allocation6 + $0x5]]
        %s242 = sld [smem:[#allocation6 + $0x6]]
        %s243 = sld [smem:[#allocation6 + $0x7]]
        %s244 = sld [smem:[#allocation6 + $0x8]]
        %s245 = sld [smem:[#allocation6 + $0x9]]
        %s246 = sld [smem:[#allocation6 + $0xa]]
        %s247 = sld [smem:[#allocation6 + $0xb]]
        %s248 = sld [smem:[#allocation6 + $0xc]]
        %s249 = sld [smem:[#allocation6 + $0xd]]
        %s250 = sld [smem:[#allocation6 + $0xe]]
        %s251 = sld [smem:[#allocation6 + $0xf]]
        %s252 = sld [smem:[#allocation6 + $0x10]]
        %s253 = sld [smem:[#allocation6 + $0x11]]
        %s254 = sld [smem:[#allocation6 + $0x12]]
        %s255 = sld [smem:[#allocation6 + $0x13]]
        %s256 = sld [smem:[#allocation6 + $0x14]]
        %s257 = sld [smem:[#allocation6 + $0x15]]
        %s258 = sld [smem:[#allocation6 + $0x16]]
        %s259 = sld [smem:[#allocation6 + $0x17]]
        %s260 = sld [smem:[#allocation6 + $0x18]]
        %s261 = sld [smem:[#allocation6 + $0x19]]
        %s262 = sld [smem:[#allocation6 + $0x1a]]
        %s263 = sld [smem:[#allocation6 + $0x1b]]
        %s264 = sld [smem:[#allocation6 + $0x1c]]
        %s265 = sld [smem:[#allocation6 + $0x1d]]
        %s266 = sld [smem:[#allocation6 + $0x1e]]
        %s267 = sld [smem:[#allocation6 + $0x1f]]
        %s268 = sld [smem:[#allocation6 + $0x20]]
        %s269 = sld [smem:[#allocation6 + $0x21]]
        %s270 = sld [smem:[#allocation6 + $0x22]]
        %s271 = sld [smem:[#allocation6 + $0x23]]
        %s272 = sld [smem:[#allocation6 + $0x24]]
        %s273 = sld [smem:[#allocation6 + $0x25]]
        %s274 = sld [smem:[#allocation6 + $0x26]]
        %s275 = sld [smem:[#allocation6 + $0x27]]
        %s276 = sld [smem:[#allocation6 + $0x28]]
        %s277 = sld [smem:[#allocation6 + $0x29]]
        %s278 = sld [smem:[#allocation6 + $0x2a]]
        %s279 = sld [smem:[#allocation6 + $0x2b]]
        %s280 = sld [smem:[#allocation6 + $0x2c]]
        %s281 = sld [smem:[#allocation6 + $0x2d]]
        %s282 = sld [smem:[#allocation6 + $0x2e]]
        %s283 = sld [smem:[#allocation6 + $0x2f]]
        %s284 = sld [smem:[#allocation6 + $0x30]]
        %s285 = sld [smem:[#allocation6 + $0x31]]
        %s286 = sld [smem:[#allocation6 + $0x32]]
        %s287 = sld [smem:[#allocation6 + $0x33]]
        %s288 = sld [smem:[#allocation6 + $0x34]]
        %s289 = sld [smem:[#allocation6 + $0x35]]
        %s290 = sld [smem:[#allocation6 + $0x36]]
        %s291 = sld [smem:[#allocation6 + $0x37]]
        %s292 = sld [smem:[#allocation6 + $0x38]]
        %s293 = sld [smem:[#allocation6 + $0x39]]
        %s294 = sld [smem:[#allocation6 + $0x3a]]
        %s295 = sld [smem:[#allocation6 + $0x3b]]
        %s296 = sld [smem:[#allocation6 + $0x3c]]
        %s297 = sld [smem:[#allocation6 + $0x3d]]
        %s298 = sld [smem:[#allocation6 + $0x3e]]
        %s299 = sld [smem:[#allocation6 + $0x3f]]
        %s300 = sld [smem:[#allocation6 + $0x40]]
        %s301 = sld [smem:[#allocation6 + $0x41]]
        %s302 = sld [smem:[#allocation6 + $0x42]]
        %s303 = sld [smem:[#allocation6 + $0x43]]
        %s304 = sld [smem:[#allocation6 + $0x44]]
        %s305 = sld [smem:[#allocation6 + $0x45]]
        %s306 = sld [smem:[#allocation6 + $0x46]]
        %s307 = sld [smem:[#allocation6 + $0x47]]
        %s308 = sld [smem:[#allocation6 + $0x48]]
        %s309 = sld [smem:[#allocation6 + $0x49]]
        %s310 = sld [smem:[#allocation6 + $0x4a]]
        %s311 = sld [smem:[#allocation6 + $0x4b]]
        %s312 = sld [smem:[#allocation6 + $0x4c]]
        %s313 = sld [smem:[#allocation6 + $0x4d]]
        %s314 = sld [smem:[#allocation6 + $0x4e]]
        %s315 = sld [smem:[#allocation6 + $0x4f]]
        %s316 = sld [smem:[#allocation6 + $0x50]]
        %s317 = sld [smem:[#allocation6 + $0x51]]
        %s318 = sld [smem:[#allocation6 + $0x52]]
        %s319 = sld [smem:[#allocation6 + $0x53]]
        %s320 = sld [smem:[#allocation6 + $0x54]]
        %s321 = sld [smem:[#allocation6 + $0x55]]
        %s322 = sld [smem:[#allocation6 + $0x56]]
        %s323 = sld [smem:[#allocation6 + $0x57]]
        %s324 = sld [smem:[#allocation6 + $0x58]]
        %s325 = sld [smem:[#allocation6 + $0x59]]
        %s326 = sld [smem:[#allocation6 + $0x5a]]
        %s327 = sld [smem:[#allocation6 + $0x5b]]
        %s328 = sld [smem:[#allocation6 + $0x5c]]
        %s329 = sld [smem:[#allocation6 + $0x5d]]
        %s330 = sld [smem:[#allocation6 + $0x5e]]
        %s331 = sld [smem:[#allocation6 + $0x5f]]
        %s332 = sld [smem:[#allocation6 + $0x60]]
        %s333 = sld [smem:[#allocation6 + $0x61]]
        %v334 = vld [vmem:[%s1] sm:$0x3]
        %337 = vrot.lane.b32.xlu0 %v220, 48
        %v338 = vpop.permute.xlu0 %337
        %339 = vrot.lane.b32.xlu0 %v221, 48
        %v340 = vpop.permute.xlu0 %339
        %vm341 = vcmask 392192
        %v342 = vsel %vm341, %v338, %v340
        %v346 = vsel %vm341, 0.0, %v338
        %v347 = vsel %vm341, %v340, 0.0
        %350 = vrot.lane.b32.xlu0 %v228, 48
        %v351 = vpop.permute.xlu0 %350
        %352 = vrot.lane.b32.xlu0 %v235, 48
        %v353 = vpop.permute.xlu0 %352
        %v354 = vsel %vm341, %v351, %v353
        %v358 = vsel %vm341, 0.0, %v351
        %v359 = vsel %vm341, %v353, 0.0
        %v360 = vstv %s236
        %v361 = vmul.f32 %v360, %v346
        %v362 = vmul.f32 %v360, %v342
        %v363 = vadd.f32 %v361, 0.0
        %v364 = vadd.f32 %v362, 0.0
        %v365 = vstv %s285
        %v366 = vmul.f32 %v365, %v358
        %v367 = vmul.f32 %v365, %v354
        %v368 = vadd.f32 %v363, %v366
        %v369 = vadd.f32 %v364, %v367
        %v370 = vstv %s243
        %v371 = vmul.f32 %v370, %v346
        %v372 = vmul.f32 %v370, %v342
        %v373 = vmul.f32 %v370, %v347
        %377 = vrot.lane.b32.xlu0 %v371, 112
        %v378 = vpop.permute.xlu0 %377
        %379 = vrot.lane.b32.xlu0 %v372, 112
        %v380 = vpop.permute.xlu0 %379
        %381 = vrot.lane.b32.xlu0 %v373, 112
        %v382 = vpop.permute.xlu0 %381
        %vm383 = vcmask 916480
        %v384 = vsel %vm383, %v378, %v380
        %v385 = vsel %vm383, %v380, %v382
        %v388 = vadd.f32 %v368, %v384
        %v389 = vadd.f32 %v369, %v385
        %v390 = vstv %s292
        %v391 = vmul.f32 %v390, %v358
        %v392 = vmul.f32 %v390, %v354
        %v393 = vmul.f32 %v390, %v359
        %397 = vrot.lane.b32.xlu0 %v391, 112
        %v398 = vpop.permute.xlu0 %397
        %399 = vrot.lane.b32.xlu0 %v392, 112
        %v400 = vpop.permute.xlu0 %399
        %401 = vrot.lane.b32.xlu0 %v393, 112
        %v402 = vpop.permute.xlu0 %401
        %v403 = vsel %vm383, %v398, %v400
        %v404 = vsel %vm383, %v400, %v402
        %v407 = vadd.f32 %v388, %v403
        %v408 = vadd.f32 %v389, %v404
        %v409 = vstv %s250
        %v410 = vmul.f32 %v409, %v346
        %v411 = vmul.f32 %v409, %v342
        %v412 = vmul.f32 %v409, %v347
        %416 = vrot.lane.b32.xlu0 %v410, 96
        %v417 = vpop.permute.xlu0 %416
        %418 = vrot.lane.b32.xlu0 %v411, 96
        %v419 = vpop.permute.xlu0 %418
        %420 = vrot.lane.b32.xlu0 %v412, 96
        %v421 = vpop.permute.xlu0 %420
        %vm422 = vcmask 785408
        %v423 = vsel %vm422, %v417, %v419
        %v424 = vsel %vm422, %v419, %v421
        %v427 = vadd.f32 %v407, %v423
        %v428 = vadd.f32 %v408, %v424
        %v429 = vstv %s299
        %v430 = vmul.f32 %v429, %v358
        %v431 = vmul.f32 %v429, %v354
        %v432 = vmul.f32 %v429, %v359
        %436 = vrot.lane.b32.xlu0 %v430, 96
        %v437 = vpop.permute.xlu0 %436
        %438 = vrot.lane.b32.xlu0 %v431, 96
        %v439 = vpop.permute.xlu0 %438
        %440 = vrot.lane.b32.xlu0 %v432, 96
        %v441 = vpop.permute.xlu0 %440
        %v442 = vsel %vm422, %v437, %v439
        %v443 = vsel %vm422, %v439, %v441
        %v446 = vadd.f32 %v427, %v442
        %v447 = vadd.f32 %v428, %v443
        %v448 = vstv %s257
        %v449 = vmul.f32 %v448, %v346
        %v450 = vmul.f32 %v448, %v342
        %v451 = vmul.f32 %v448, %v347
        %455 = vrot.lane.b32.xlu0 %v449, 80
        %v456 = vpop.permute.xlu0 %455
        %457 = vrot.lane.b32.xlu0 %v450, 80
        %v458 = vpop.permute.xlu0 %457
        %459 = vrot.lane.b32.xlu0 %v451, 80
        %v460 = vpop.permute.xlu0 %459
        %vm461 = vcmask 654336
        %v462 = vsel %vm461, %v456, %v458
        %v463 = vsel %vm461, %v458, %v460
        %v466 = vadd.f32 %v446, %v462
        %v467 = vadd.f32 %v447, %v463
        %v468 = vstv %s306
        %v469 = vmul.f32 %v468, %v358
        %v470 = vmul.f32 %v468, %v354
        %v471 = vmul.f32 %v468, %v359
        %475 = vrot.lane.b32.xlu0 %v469, 80
        %v476 = vpop.permute.xlu0 %475
        %477 = vrot.lane.b32.xlu0 %v470, 80
        %v478 = vpop.permute.xlu0 %477
        %479 = vrot.lane.b32.xlu0 %v471, 80
        %v480 = vpop.permute.xlu0 %479
        %v481 = vsel %vm461, %v476, %v478
        %v482 = vsel %vm461, %v478, %v480
        %v485 = vadd.f32 %v466, %v481
        %v486 = vadd.f32 %v467, %v482
        %v487 = vstv %s264
        %v488 = vmul.f32 %v487, %v346
        %v489 = vmul.f32 %v487, %v342
        %v490 = vmul.f32 %v487, %v347
        %494 = vrot.lane.b32.xlu0 %v488, 64
        %v495 = vpop.permute.xlu0 %494
        %496 = vrot.lane.b32.xlu0 %v489, 64
        %v497 = vpop.permute.xlu0 %496
        %498 = vrot.lane.b32.xlu0 %v490, 64
        %v499 = vpop.permute.xlu0 %498
        %vm500 = vcmask 523264
        %v501 = vsel %vm500, %v495, %v497
        %v502 = vsel %vm500, %v497, %v499
        %v505 = vadd.f32 %v485, %v501
        %v506 = vadd.f32 %v486, %v502
        %v507 = vstv %s313
        %v508 = vmul.f32 %v507, %v358
        %v509 = vmul.f32 %v507, %v354
        %v510 = vmul.f32 %v507, %v359
        %514 = vrot.lane.b32.xlu0 %v508, 64
        %v515 = vpop.permute.xlu0 %514
        %516 = vrot.lane.b32.xlu0 %v509, 64
        %v517 = vpop.permute.xlu0 %516
        %518 = vrot.lane.b32.xlu0 %v510, 64
        %v519 = vpop.permute.xlu0 %518
        %v520 = vsel %vm500, %v515, %v517
        %v521 = vsel %vm500, %v517, %v519
        %v524 = vadd.f32 %v505, %v520
        %v525 = vadd.f32 %v506, %v521
        %v526 = vstv %s271
        %v527 = vmul.f32 %v526, %v346
        %v528 = vmul.f32 %v526, %v342
        %v529 = vmul.f32 %v526, %v347
        %533 = vrot.lane.b32.xlu0 %v527, 48
        %v534 = vpop.permute.xlu0 %533
        %535 = vrot.lane.b32.xlu0 %v528, 48
        %v536 = vpop.permute.xlu0 %535
        %537 = vrot.lane.b32.xlu0 %v529, 48
        %v538 = vpop.permute.xlu0 %537
        %v539 = vsel %vm341, %v534, %v536
        %v540 = vsel %vm341, %v536, %v538
        %v543 = vadd.f32 %v524, %v539
        %v544 = vadd.f32 %v525, %v540
        %v545 = vstv %s320
        %v546 = vmul.f32 %v545, %v358
        %v547 = vmul.f32 %v545, %v354
        %v548 = vmul.f32 %v545, %v359
        %552 = vrot.lane.b32.xlu0 %v546, 48
        %v553 = vpop.permute.xlu0 %552
        %554 = vrot.lane.b32.xlu0 %v547, 48
        %v555 = vpop.permute.xlu0 %554
        %556 = vrot.lane.b32.xlu0 %v548, 48
        %v557 = vpop.permute.xlu0 %556
        %v558 = vsel %vm341, %v553, %v555
        %v559 = vsel %vm341, %v555, %v557
        %v562 = vadd.f32 %v543, %v558
        %v563 = vadd.f32 %v544, %v559
        %v564 = vstv %s278
        %v565 = vmul.f32 %v564, %v346
        %v566 = vmul.f32 %v564, %v342
        %v567 = vmul.f32 %v564, %v347
        %571 = vrot.lane.b32.xlu0 %v565, 32
        %v572 = vpop.permute.xlu0 %571
        %573 = vrot.lane.b32.xlu0 %v566, 32
        %v574 = vpop.permute.xlu0 %573
        %575 = vrot.lane.b32.xlu0 %v567, 32
        %v576 = vpop.permute.xlu0 %575
        %vm577 = vcmask 261120
        %v578 = vsel %vm577, %v572, %v574
        %v579 = vsel %vm577, %v574, %v576
        %v582 = vadd.f32 %v562, %v578
        %v583 = vadd.f32 %v563, %v579
        %v584 = vstv %s327
        %v585 = vmul.f32 %v584, %v358
        %v586 = vmul.f32 %v584, %v354
        %v587 = vmul.f32 %v584, %v359
        %591 = vrot.lane.b32.xlu0 %v585, 32
        %v592 = vpop.permute.xlu0 %591
        %593 = vrot.lane.b32.xlu0 %v586, 32
        %v594 = vpop.permute.xlu0 %593
        %595 = vrot.lane.b32.xlu0 %v587, 32
        %v596 = vpop.permute.xlu0 %595
        %v597 = vsel %vm577, %v592, %v594
        %v598 = vsel %vm577, %v594, %v596
        %v601 = vadd.f32 %v582, %v597
        %v602 = vadd.f32 %v583, %v598
        %605 = vrot.lane.b32.xlu0 %v601, 3
        %v606 = vpop.permute.xlu0 %605
        %607 = vrot.lane.b32.xlu0 %v602, 3
        %v608 = vpop.permute.xlu0 %607
        %vm609 = vcmask 23552
        %v610 = vsel %vm609, %v606, %v608
        %v612 = vsel %vm609, 0.0, %v606
        %vm613 = vcmp.ge.s32.totalorder %v334, 3
        %v615 = vcombine.low %v612, %v610
        %v617 = vunpack.c.l.s4 1966171168
        %v618 = vunpack.c.0.s8 %v617
        %v619 = vlaneseq
        %v620 = vshrl.u32 %v619, 7
        %v621 = vsub.s32 %v618, %v620
        %v622 = vrot.slane %v615, %v621
        %v624 = vunpack.c.l.s4 1966171168
        %v625 = vunpack.c.0.s8 %v624
        %v626 = vlaneseq
        %v627 = vshrl.u32 %v626, 7
        %v628 = vsub.s32 %v625, %v627
        %v629 = vrot.slane %v622, %v628
        %v631 = vsel %vm613, %v629, 0.0
        %v632 = vadd.f32 %v631, 0.0
        %v633 = vstv %s237
        %v634 = vmul.f32 %v633, %v346
        %v635 = vmul.f32 %v633, %v342
        %v636 = vadd.f32 %v634, 0.0
        %v637 = vadd.f32 %v635, 0.0
        %v638 = vstv %s286
        %v639 = vmul.f32 %v638, %v358
        %v640 = vmul.f32 %v638, %v354
        %v641 = vadd.f32 %v636, %v639
        %v642 = vadd.f32 %v637, %v640
        %v643 = vstv %s244
        %v644 = vmul.f32 %v643, %v346
        %v645 = vmul.f32 %v643, %v342
        %v646 = vmul.f32 %v643, %v347
        %650 = vrot.lane.b32.xlu0 %v644, 112
        %v651 = vpop.permute.xlu0 %650
        %652 = vrot.lane.b32.xlu0 %v645, 112
        %v653 = vpop.permute.xlu0 %652
        %654 = vrot.lane.b32.xlu0 %v646, 112
        %v655 = vpop.permute.xlu0 %654
        %v656 = vsel %vm383, %v651, %v653
        %v657 = vsel %vm383, %v653, %v655
        %v660 = vadd.f32 %v641, %v656
        %v661 = vadd.f32 %v642, %v657
        %v662 = vstv %s293
        %v663 = vmul.f32 %v662, %v358
        %v664 = vmul.f32 %v662, %v354
        %v665 = vmul.f32 %v662, %v359
        %669 = vrot.lane.b32.xlu0 %v663, 112
        %v670 = vpop.permute.xlu0 %669
        %671 = vrot.lane.b32.xlu0 %v664, 112
        %v672 = vpop.permute.xlu0 %671
        %673 = vrot.lane.b32.xlu0 %v665, 112
        %v674 = vpop.permute.xlu0 %673
        %v675 = vsel %vm383, %v670, %v672
        %v676 = vsel %vm383, %v672, %v674
        %v679 = vadd.f32 %v660, %v675
        %v680 = vadd.f32 %v661, %v676
        %v681 = vstv %s251
        %v682 = vmul.f32 %v681, %v346
        %v683 = vmul.f32 %v681, %v342
        %v684 = vmul.f32 %v681, %v347
        %688 = vrot.lane.b32.xlu0 %v682, 96
        %v689 = vpop.permute.xlu0 %688
        %690 = vrot.lane.b32.xlu0 %v683, 96
        %v691 = vpop.permute.xlu0 %690
        %692 = vrot.lane.b32.xlu0 %v684, 96
        %v693 = vpop.permute.xlu0 %692
        %v694 = vsel %vm422, %v689, %v691
        %v695 = vsel %vm422, %v691, %v693
        %v698 = vadd.f32 %v679, %v694
        %v699 = vadd.f32 %v680, %v695
        %v700 = vstv %s300
        %v701 = vmul.f32 %v700, %v358
        %v702 = vmul.f32 %v700, %v354
        %v703 = vmul.f32 %v700, %v359
        %707 = vrot.lane.b32.xlu0 %v701, 96
        %v708 = vpop.permute.xlu0 %707
        %709 = vrot.lane.b32.xlu0 %v702, 96
        %v710 = vpop.permute.xlu0 %709
        %711 = vrot.lane.b32.xlu0 %v703, 96
        %v712 = vpop.permute.xlu0 %711
        %v713 = vsel %vm422, %v708, %v710
        %v714 = vsel %vm422, %v710, %v712
        %v717 = vadd.f32 %v698, %v713
        %v718 = vadd.f32 %v699, %v714
        %v719 = vstv %s258
        %v720 = vmul.f32 %v719, %v346
        %v721 = vmul.f32 %v719, %v342
        %v722 = vmul.f32 %v719, %v347
        %726 = vrot.lane.b32.xlu0 %v720, 80
        %v727 = vpop.permute.xlu0 %726
        %728 = vrot.lane.b32.xlu0 %v721, 80
        %v729 = vpop.permute.xlu0 %728
        %730 = vrot.lane.b32.xlu0 %v722, 80
        %v731 = vpop.permute.xlu0 %730
        %v732 = vsel %vm461, %v727, %v729
        %v733 = vsel %vm461, %v729, %v731
        %v736 = vadd.f32 %v717, %v732
        %v737 = vadd.f32 %v718, %v733
        %v738 = vstv %s307
        %v739 = vmul.f32 %v738, %v358
        %v740 = vmul.f32 %v738, %v354
        %v741 = vmul.f32 %v738, %v359
        %745 = vrot.lane.b32.xlu0 %v739, 80
        %v746 = vpop.permute.xlu0 %745
        %747 = vrot.lane.b32.xlu0 %v740, 80
        %v748 = vpop.permute.xlu0 %747
        %749 = vrot.lane.b32.xlu0 %v741, 80
        %v750 = vpop.permute.xlu0 %749
        %v751 = vsel %vm461, %v746, %v748
        %v752 = vsel %vm461, %v748, %v750
        %v755 = vadd.f32 %v736, %v751
        %v756 = vadd.f32 %v737, %v752
        %v757 = vstv %s265
        %v758 = vmul.f32 %v757, %v346
        %v759 = vmul.f32 %v757, %v342
        %v760 = vmul.f32 %v757, %v347
        %764 = vrot.lane.b32.xlu0 %v758, 64
        %v765 = vpop.permute.xlu0 %764
        %766 = vrot.lane.b32.xlu0 %v759, 64
        %v767 = vpop.permute.xlu0 %766
        %768 = vrot.lane.b32.xlu0 %v760, 64
        %v769 = vpop.permute.xlu0 %768
        %v770 = vsel %vm500, %v765, %v767
        %v771 = vsel %vm500, %v767, %v769
        %v774 = vadd.f32 %v755, %v770
        %v775 = vadd.f32 %v756, %v771
        %v776 = vstv %s314
        %v777 = vmul.f32 %v776, %v358
        %v778 = vmul.f32 %v776, %v354
        %v779 = vmul.f32 %v776, %v359
        %783 = vrot.lane.b32.xlu0 %v777, 64
        %v784 = vpop.permute.xlu0 %783
        %785 = vrot.lane.b32.xlu0 %v778, 64
        %v786 = vpop.permute.xlu0 %785
        %787 = vrot.lane.b32.xlu0 %v779, 64
        %v788 = vpop.permute.xlu0 %787
        %v789 = vsel %vm500, %v784, %v786
        %v790 = vsel %vm500, %v786, %v788
        %v793 = vadd.f32 %v774, %v789
        %v794 = vadd.f32 %v775, %v790
        %v795 = vstv %s272
        %v796 = vmul.f32 %v795, %v346
        %v797 = vmul.f32 %v795, %v342
        %v798 = vmul.f32 %v795, %v347
        %802 = vrot.lane.b32.xlu0 %v796, 48
        %v803 = vpop.permute.xlu0 %802
        %804 = vrot.lane.b32.xlu0 %v797, 48
        %v805 = vpop.permute.xlu0 %804
        %806 = vrot.lane.b32.xlu0 %v798, 48
        %v807 = vpop.permute.xlu0 %806
        %v808 = vsel %vm341, %v803, %v805
        %v809 = vsel %vm341, %v805, %v807
        %v812 = vadd.f32 %v793, %v808
        %v813 = vadd.f32 %v794, %v809
        %v814 = vstv %s321
        %v815 = vmul.f32 %v814, %v358
        %v816 = vmul.f32 %v814, %v354
        %v817 = vmul.f32 %v814, %v359
        %821 = vrot.lane.b32.xlu0 %v815, 48
        %v822 = vpop.permute.xlu0 %821
        %823 = vrot.lane.b32.xlu0 %v816, 48
        %v824 = vpop.permute.xlu0 %823
        %825 = vrot.lane.b32.xlu0 %v817, 48
        %v826 = vpop.permute.xlu0 %825
        %v827 = vsel %vm341, %v822, %v824
        %v828 = vsel %vm341, %v824, %v826
        %v831 = vadd.f32 %v812, %v827
        %v832 = vadd.f32 %v813, %v828
        %v833 = vstv %s279
        %v834 = vmul.f32 %v833, %v346
        %v835 = vmul.f32 %v833, %v342
        %v836 = vmul.f32 %v833, %v347
        %840 = vrot.lane.b32.xlu0 %v834, 32
        %v841 = vpop.permute.xlu0 %840
        %842 = vrot.lane.b32.xlu0 %v835, 32
        %v843 = vpop.permute.xlu0 %842
        %844 = vrot.lane.b32.xlu0 %v836, 32
        %v845 = vpop.permute.xlu0 %844
        %v846 = vsel %vm577, %v841, %v843
        %v847 = vsel %vm577, %v843, %v845
        %v850 = vadd.f32 %v831, %v846
        %v851 = vadd.f32 %v832, %v847
        %v852 = vstv %s328
        %v853 = vmul.f32 %v852, %v358
        %v854 = vmul.f32 %v852, %v354
        %v855 = vmul.f32 %v852, %v359
        %859 = vrot.lane.b32.xlu0 %v853, 32
        %v860 = vpop.permute.xlu0 %859
        %861 = vrot.lane.b32.xlu0 %v854, 32
        %v862 = vpop.permute.xlu0 %861
        %863 = vrot.lane.b32.xlu0 %v855, 32
        %v864 = vpop.permute.xlu0 %863
        %v865 = vsel %vm577, %v860, %v862
        %v866 = vsel %vm577, %v862, %v864
        %v869 = vadd.f32 %v850, %v865
        %v870 = vadd.f32 %v851, %v866
        %873 = vrot.lane.b32.xlu0 %v869, 3
        %v874 = vpop.permute.xlu0 %873
        %875 = vrot.lane.b32.xlu0 %v870, 3
        %v876 = vpop.permute.xlu0 %875
        %v877 = vsel %vm609, %v874, %v876
        %v880 = vsel %vm609, 0.0, %v874
        %v881 = vsel %vm609, %v876, 0.0
        %vm882 = vcmp.ge.s32.totalorder %v334, 2
        %v885 = vcombine.low %v880, %v877
        %v887 = vunpack.c.l.s4 1966171168
        %v888 = vunpack.c.0.s8 %v887
        %v889 = vlaneseq
        %v890 = vshrl.u32 %v889, 7
        %v891 = vsub.s32 %v888, %v890
        %v892 = vrot.slane %v885, %v891
        %v894 = vunpack.c.l.s4 1966171168
        %v895 = vunpack.c.0.s8 %v894
        %v896 = vlaneseq
        %v897 = vshrl.u32 %v896, 7
        %v898 = vsub.s32 %v895, %v897
        %v899 = vrot.slane %v881, %v898
        %v900 = vcombine.low %v892, %v899
        %v902 = vunpack.c.l.s4 1966171168
        %v903 = vunpack.c.0.s8 %v902
        %v904 = vlaneseq
        %v905 = vshrl.u32 %v904, 7
        %v906 = vsub.s32 %v903, %v905
        %v907 = vrot.slane %v900, %v906
        %908 = vrot.lane.b32.xlu0 %v907, 127
        %v909 = vpop.permute.xlu0 %908
        %v910 = vrot.slane %v909, 1
        %vm911 = vcmask 1039360
        %v912 = vsel %vm911, %v909, %v910
        %v914 = vsel %vm882, %v912, 0.0
        %v915 = vadd.f32 %v632, %v914
        %v916 = vstv %s238
        %v917 = vmul.f32 %v916, %v346
        %v918 = vmul.f32 %v916, %v342
        %v919 = vadd.f32 %v917, 0.0
        %v920 = vadd.f32 %v918, 0.0
        %v921 = vstv %s287
        %v922 = vmul.f32 %v921, %v358
        %v923 = vmul.f32 %v921, %v354
        %v924 = vadd.f32 %v919, %v922
        %v925 = vadd.f32 %v920, %v923
        %v926 = vstv %s245
        %v927 = vmul.f32 %v926, %v346
        %v928 = vmul.f32 %v926, %v342
        %v929 = vmul.f32 %v926, %v347
        %933 = vrot.lane.b32.xlu0 %v927, 112
        %v934 = vpop.permute.xlu0 %933
        %935 = vrot.lane.b32.xlu0 %v928, 112
        %v936 = vpop.permute.xlu0 %935
        %937 = vrot.lane.b32.xlu0 %v929, 112
        %v938 = vpop.permute.xlu0 %937
        %v939 = vsel %vm383, %v934, %v936
        %v940 = vsel %vm383, %v936, %v938
        %v943 = vadd.f32 %v924, %v939
        %v944 = vadd.f32 %v925, %v940
        %v945 = vstv %s294
        %v946 = vmul.f32 %v945, %v358
        %v947 = vmul.f32 %v945, %v354
        %v948 = vmul.f32 %v945, %v359
        %952 = vrot.lane.b32.xlu0 %v946, 112
        %v953 = vpop.permute.xlu0 %952
        %954 = vrot.lane.b32.xlu0 %v947, 112
        %v955 = vpop.permute.xlu0 %954
        %956 = vrot.lane.b32.xlu0 %v948, 112
        %v957 = vpop.permute.xlu0 %956
        %v958 = vsel %vm383, %v953, %v955
        %v959 = vsel %vm383, %v955, %v957
        %v962 = vadd.f32 %v943, %v958
        %v963 = vadd.f32 %v944, %v959
        %v964 = vstv %s252
        %v965 = vmul.f32 %v964, %v346
        %v966 = vmul.f32 %v964, %v342
        %v967 = vmul.f32 %v964, %v347
        %971 = vrot.lane.b32.xlu0 %v965, 96
        %v972 = vpop.permute.xlu0 %971
        %973 = vrot.lane.b32.xlu0 %v966, 96
        %v974 = vpop.permute.xlu0 %973
        %975 = vrot.lane.b32.xlu0 %v967, 96
        %v976 = vpop.permute.xlu0 %975
        %v977 = vsel %vm422, %v972, %v974
        %v978 = vsel %vm422, %v974, %v976
        %v981 = vadd.f32 %v962, %v977
        %v982 = vadd.f32 %v963, %v978
        %v983 = vstv %s301
        %v984 = vmul.f32 %v983, %v358
        %v985 = vmul.f32 %v983, %v354
        %v986 = vmul.f32 %v983, %v359
        %990 = vrot.lane.b32.xlu0 %v984, 96
        %v991 = vpop.permute.xlu0 %990
        %992 = vrot.lane.b32.xlu0 %v985, 96
        %v993 = vpop.permute.xlu0 %992
        %994 = vrot.lane.b32.xlu0 %v986, 96
        %v995 = vpop.permute.xlu0 %994
        %v996 = vsel %vm422, %v991, %v993
        %v997 = vsel %vm422, %v993, %v995
        %v1000 = vadd.f32 %v981, %v996
        %v1001 = vadd.f32 %v982, %v997
        %v1002 = vstv %s259
        %v1003 = vmul.f32 %v1002, %v346
        %v1004 = vmul.f32 %v1002, %v342
        %v1005 = vmul.f32 %v1002, %v347
        %1009 = vrot.lane.b32.xlu0 %v1003, 80
        %v1010 = vpop.permute.xlu0 %1009
        %1011 = vrot.lane.b32.xlu0 %v1004, 80
        %v1012 = vpop.permute.xlu0 %1011
        %1013 = vrot.lane.b32.xlu0 %v1005, 80
        %v1014 = vpop.permute.xlu0 %1013
        %v1015 = vsel %vm461, %v1010, %v1012
        %v1016 = vsel %vm461, %v1012, %v1014
        %v1019 = vadd.f32 %v1000, %v1015
        %v1020 = vadd.f32 %v1001, %v1016
        %v1021 = vstv %s308
        %v1022 = vmul.f32 %v1021, %v358
        %v1023 = vmul.f32 %v1021, %v354
        %v1024 = vmul.f32 %v1021, %v359
        %1028 = vrot.lane.b32.xlu0 %v1022, 80
        %v1029 = vpop.permute.xlu0 %1028
        %1030 = vrot.lane.b32.xlu0 %v1023, 80
        %v1031 = vpop.permute.xlu0 %1030
        %1032 = vrot.lane.b32.xlu0 %v1024, 80
        %v1033 = vpop.permute.xlu0 %1032
        %v1034 = vsel %vm461, %v1029, %v1031
        %v1035 = vsel %vm461, %v1031, %v1033
        %v1038 = vadd.f32 %v1019, %v1034
        %v1039 = vadd.f32 %v1020, %v1035
        %v1040 = vstv %s266
        %v1041 = vmul.f32 %v1040, %v346
        %v1042 = vmul.f32 %v1040, %v342
        %v1043 = vmul.f32 %v1040, %v347
        %1047 = vrot.lane.b32.xlu0 %v1041, 64
        %v1048 = vpop.permute.xlu0 %1047
        %1049 = vrot.lane.b32.xlu0 %v1042, 64
        %v1050 = vpop.permute.xlu0 %1049
        %1051 = vrot.lane.b32.xlu0 %v1043, 64
        %v1052 = vpop.permute.xlu0 %1051
        %v1053 = vsel %vm500, %v1048, %v1050
        %v1054 = vsel %vm500, %v1050, %v1052
        %v1057 = vadd.f32 %v1038, %v1053
        %v1058 = vadd.f32 %v1039, %v1054
        %v1059 = vstv %s315
        %v1060 = vmul.f32 %v1059, %v358
        %v1061 = vmul.f32 %v1059, %v354
        %v1062 = vmul.f32 %v1059, %v359
        %1066 = vrot.lane.b32.xlu0 %v1060, 64
        %v1067 = vpop.permute.xlu0 %1066
        %1068 = vrot.lane.b32.xlu0 %v1061, 64
        %v1069 = vpop.permute.xlu0 %1068
        %1070 = vrot.lane.b32.xlu0 %v1062, 64
        %v1071 = vpop.permute.xlu0 %1070
        %v1072 = vsel %vm500, %v1067, %v1069
        %v1073 = vsel %vm500, %v1069, %v1071
        %v1076 = vadd.f32 %v1057, %v1072
        %v1077 = vadd.f32 %v1058, %v1073
        %v1078 = vstv %s273
        %v1079 = vmul.f32 %v1078, %v346
        %v1080 = vmul.f32 %v1078, %v342
        %v1081 = vmul.f32 %v1078, %v347
        %1085 = vrot.lane.b32.xlu0 %v1079, 48
        %v1086 = vpop.permute.xlu0 %1085
        %1087 = vrot.lane.b32.xlu0 %v1080, 48
        %v1088 = vpop.permute.xlu0 %1087
        %1089 = vrot.lane.b32.xlu0 %v1081, 48
        %v1090 = vpop.permute.xlu0 %1089
        %v1091 = vsel %vm341, %v1086, %v1088
        %v1092 = vsel %vm341, %v1088, %v1090
        %v1095 = vadd.f32 %v1076, %v1091
        %v1096 = vadd.f32 %v1077, %v1092
        %v1097 = vstv %s322
        %v1098 = vmul.f32 %v1097, %v358
        %v1099 = vmul.f32 %v1097, %v354
        %v1100 = vmul.f32 %v1097, %v359
        %1104 = vrot.lane.b32.xlu0 %v1098, 48
        %v1105 = vpop.permute.xlu0 %1104
        %1106 = vrot.lane.b32.xlu0 %v1099, 48
        %v1107 = vpop.permute.xlu0 %1106
        %1108 = vrot.lane.b32.xlu0 %v1100, 48
        %v1109 = vpop.permute.xlu0 %1108
        %v1110 = vsel %vm341, %v1105, %v1107
        %v1111 = vsel %vm341, %v1107, %v1109
        %v1114 = vadd.f32 %v1095, %v1110
        %v1115 = vadd.f32 %v1096, %v1111
        %v1116 = vstv %s280
        %v1117 = vmul.f32 %v1116, %v346
        %v1118 = vmul.f32 %v1116, %v342
        %v1119 = vmul.f32 %v1116, %v347
        %1123 = vrot.lane.b32.xlu0 %v1117, 32
        %v1124 = vpop.permute.xlu0 %1123
        %1125 = vrot.lane.b32.xlu0 %v1118, 32
        %v1126 = vpop.permute.xlu0 %1125
        %1127 = vrot.lane.b32.xlu0 %v1119, 32
        %v1128 = vpop.permute.xlu0 %1127
        %v1129 = vsel %vm577, %v1124, %v1126
        %v1130 = vsel %vm577, %v1126, %v1128
        %v1133 = vadd.f32 %v1114, %v1129
        %v1134 = vadd.f32 %v1115, %v1130
        %v1135 = vstv %s329
        %v1136 = vmul.f32 %v1135, %v358
        %v1137 = vmul.f32 %v1135, %v354
        %v1138 = vmul.f32 %v1135, %v359
        %1142 = vrot.lane.b32.xlu0 %v1136, 32
        %v1143 = vpop.permute.xlu0 %1142
        %1144 = vrot.lane.b32.xlu0 %v1137, 32
        %v1145 = vpop.permute.xlu0 %1144
        %1146 = vrot.lane.b32.xlu0 %v1138, 32
        %v1147 = vpop.permute.xlu0 %1146
        %v1148 = vsel %vm577, %v1143, %v1145
        %v1149 = vsel %vm577, %v1145, %v1147
        %v1152 = vadd.f32 %v1133, %v1148
        %v1153 = vadd.f32 %v1134, %v1149
        %1156 = vrot.lane.b32.xlu0 %v1152, 3
        %v1157 = vpop.permute.xlu0 %1156
        %1158 = vrot.lane.b32.xlu0 %v1153, 3
        %v1159 = vpop.permute.xlu0 %1158
        %v1160 = vsel %vm609, %v1157, %v1159
        %v1163 = vsel %vm609, 0.0, %v1157
        %v1164 = vsel %vm609, %v1159, 0.0
        %vm1165 = vcmp.ge.s32.totalorder %v334, 1
        %v1168 = vcombine.low %v1163, %v1160
        %v1170 = vunpack.c.l.s4 1966171168
        %v1171 = vunpack.c.0.s8 %v1170
        %v1172 = vlaneseq
        %v1173 = vshrl.u32 %v1172, 7
        %v1174 = vsub.s32 %v1171, %v1173
        %v1175 = vrot.slane %v1168, %v1174
        %v1177 = vunpack.c.l.s4 1966171168
        %v1178 = vunpack.c.0.s8 %v1177
        %v1179 = vlaneseq
        %v1180 = vshrl.u32 %v1179, 7
        %v1181 = vsub.s32 %v1178, %v1180
        %v1182 = vrot.slane %v1164, %v1181
        %v1183 = vcombine.low %v1175, %v1182
        %v1185 = vunpack.c.l.s4 1966171168
        %v1186 = vunpack.c.0.s8 %v1185
        %v1187 = vlaneseq
        %v1188 = vshrl.u32 %v1187, 7
        %v1189 = vsub.s32 %v1186, %v1188
        %v1190 = vrot.slane %v1183, %v1189
        %1191 = vrot.lane.b32.xlu0 %v1190, 126
        %v1192 = vpop.permute.xlu0 %1191
        %v1193 = vrot.slane %v1192, 1
        %vm1194 = vcmask 1031168
        %v1195 = vsel %vm1194, %v1192, %v1193
        %v1197 = vsel %vm1165, %v1195, 0.0
        %v1198 = vadd.f32 %v915, %v1197
        %v1199 = vstv %s239
        %v1200 = vmul.f32 %v1199, %v346
        %v1201 = vmul.f32 %v1199, %v342
        %v1202 = vadd.f32 %v1200, 0.0
        %v1203 = vadd.f32 %v1201, 0.0
        %v1204 = vstv %s288
        %v1205 = vmul.f32 %v1204, %v358
        %v1206 = vmul.f32 %v1204, %v354
        %v1207 = vadd.f32 %v1202, %v1205
        %v1208 = vadd.f32 %v1203, %v1206
        %v1209 = vstv %s246
        %v1210 = vmul.f32 %v1209, %v346
        %v1211 = vmul.f32 %v1209, %v342
        %v1212 = vmul.f32 %v1209, %v347
        %1216 = vrot.lane.b32.xlu0 %v1210, 112
        %v1217 = vpop.permute.xlu0 %1216
        %1218 = vrot.lane.b32.xlu0 %v1211, 112
        %v1219 = vpop.permute.xlu0 %1218
        %1220 = vrot.lane.b32.xlu0 %v1212, 112
        %v1221 = vpop.permute.xlu0 %1220
        %v1222 = vsel %vm383, %v1217, %v1219
        %v1223 = vsel %vm383, %v1219, %v1221
        %v1226 = vadd.f32 %v1207, %v1222
        %v1227 = vadd.f32 %v1208, %v1223
        %v1228 = vstv %s295
        %v1229 = vmul.f32 %v1228, %v358
        %v1230 = vmul.f32 %v1228, %v354
        %v1231 = vmul.f32 %v1228, %v359
        %1235 = vrot.lane.b32.xlu0 %v1229, 112
        %v1236 = vpop.permute.xlu0 %1235
        %1237 = vrot.lane.b32.xlu0 %v1230, 112
        %v1238 = vpop.permute.xlu0 %1237
        %1239 = vrot.lane.b32.xlu0 %v1231, 112
        %v1240 = vpop.permute.xlu0 %1239
        %v1241 = vsel %vm383, %v1236, %v1238
        %v1242 = vsel %vm383, %v1238, %v1240
        %v1245 = vadd.f32 %v1226, %v1241
        %v1246 = vadd.f32 %v1227, %v1242
        %v1247 = vstv %s253
        %v1248 = vmul.f32 %v1247, %v346
        %v1249 = vmul.f32 %v1247, %v342
        %v1250 = vmul.f32 %v1247, %v347
        %1254 = vrot.lane.b32.xlu0 %v1248, 96
        %v1255 = vpop.permute.xlu0 %1254
        %1256 = vrot.lane.b32.xlu0 %v1249, 96
        %v1257 = vpop.permute.xlu0 %1256
        %1258 = vrot.lane.b32.xlu0 %v1250, 96
        %v1259 = vpop.permute.xlu0 %1258
        %v1260 = vsel %vm422, %v1255, %v1257
        %v1261 = vsel %vm422, %v1257, %v1259
        %v1264 = vadd.f32 %v1245, %v1260
        %v1265 = vadd.f32 %v1246, %v1261
        %v1266 = vstv %s302
        %v1267 = vmul.f32 %v1266, %v358
        %v1268 = vmul.f32 %v1266, %v354
        %v1269 = vmul.f32 %v1266, %v359
        %1273 = vrot.lane.b32.xlu0 %v1267, 96
        %v1274 = vpop.permute.xlu0 %1273
        %1275 = vrot.lane.b32.xlu0 %v1268, 96
        %v1276 = vpop.permute.xlu0 %1275
        %1277 = vrot.lane.b32.xlu0 %v1269, 96
        %v1278 = vpop.permute.xlu0 %1277
        %v1279 = vsel %vm422, %v1274, %v1276
        %v1280 = vsel %vm422, %v1276, %v1278
        %v1283 = vadd.f32 %v1264, %v1279
        %v1284 = vadd.f32 %v1265, %v1280
        %v1285 = vstv %s260
        %v1286 = vmul.f32 %v1285, %v346
        %v1287 = vmul.f32 %v1285, %v342
        %v1288 = vmul.f32 %v1285, %v347
        %1292 = vrot.lane.b32.xlu0 %v1286, 80
        %v1293 = vpop.permute.xlu0 %1292
        %1294 = vrot.lane.b32.xlu0 %v1287, 80
        %v1295 = vpop.permute.xlu0 %1294
        %1296 = vrot.lane.b32.xlu0 %v1288, 80
        %v1297 = vpop.permute.xlu0 %1296
        %v1298 = vsel %vm461, %v1293, %v1295
        %v1299 = vsel %vm461, %v1295, %v1297
        %v1302 = vadd.f32 %v1283, %v1298
        %v1303 = vadd.f32 %v1284, %v1299
        %v1304 = vstv %s309
        %v1305 = vmul.f32 %v1304, %v358
        %v1306 = vmul.f32 %v1304, %v354
        %v1307 = vmul.f32 %v1304, %v359
        %1311 = vrot.lane.b32.xlu0 %v1305, 80
        %v1312 = vpop.permute.xlu0 %1311
        %1313 = vrot.lane.b32.xlu0 %v1306, 80
        %v1314 = vpop.permute.xlu0 %1313
        %1315 = vrot.lane.b32.xlu0 %v1307, 80
        %v1316 = vpop.permute.xlu0 %1315
        %v1317 = vsel %vm461, %v1312, %v1314
        %v1318 = vsel %vm461, %v1314, %v1316
        %v1321 = vadd.f32 %v1302, %v1317
        %v1322 = vadd.f32 %v1303, %v1318
        %v1323 = vstv %s267
        %v1324 = vmul.f32 %v1323, %v346
        %v1325 = vmul.f32 %v1323, %v342
        %v1326 = vmul.f32 %v1323, %v347
        %1330 = vrot.lane.b32.xlu0 %v1324, 64
        %v1331 = vpop.permute.xlu0 %1330
        %1332 = vrot.lane.b32.xlu0 %v1325, 64
        %v1333 = vpop.permute.xlu0 %1332
        %1334 = vrot.lane.b32.xlu0 %v1326, 64
        %v1335 = vpop.permute.xlu0 %1334
        %v1336 = vsel %vm500, %v1331, %v1333
        %v1337 = vsel %vm500, %v1333, %v1335
        %v1340 = vadd.f32 %v1321, %v1336
        %v1341 = vadd.f32 %v1322, %v1337
        %v1342 = vstv %s316
        %v1343 = vmul.f32 %v1342, %v358
        %v1344 = vmul.f32 %v1342, %v354
        %v1345 = vmul.f32 %v1342, %v359
        %1349 = vrot.lane.b32.xlu0 %v1343, 64
        %v1350 = vpop.permute.xlu0 %1349
        %1351 = vrot.lane.b32.xlu0 %v1344, 64
        %v1352 = vpop.permute.xlu0 %1351
        %1353 = vrot.lane.b32.xlu0 %v1345, 64
        %v1354 = vpop.permute.xlu0 %1353
        %v1355 = vsel %vm500, %v1350, %v1352
        %v1356 = vsel %vm500, %v1352, %v1354
        %v1359 = vadd.f32 %v1340, %v1355
        %v1360 = vadd.f32 %v1341, %v1356
        %v1361 = vstv %s274
        %v1362 = vmul.f32 %v1361, %v346
        %v1363 = vmul.f32 %v1361, %v342
        %v1364 = vmul.f32 %v1361, %v347
        %1368 = vrot.lane.b32.xlu0 %v1362, 48
        %v1369 = vpop.permute.xlu0 %1368
        %1370 = vrot.lane.b32.xlu0 %v1363, 48
        %v1371 = vpop.permute.xlu0 %1370
        %1372 = vrot.lane.b32.xlu0 %v1364, 48
        %v1373 = vpop.permute.xlu0 %1372
        %v1374 = vsel %vm341, %v1369, %v1371
        %v1375 = vsel %vm341, %v1371, %v1373
        %v1378 = vadd.f32 %v1359, %v1374
        %v1379 = vadd.f32 %v1360, %v1375
        %v1380 = vstv %s323
        %v1381 = vmul.f32 %v1380, %v358
        %v1382 = vmul.f32 %v1380, %v354
        %v1383 = vmul.f32 %v1380, %v359
        %1387 = vrot.lane.b32.xlu0 %v1381, 48
        %v1388 = vpop.permute.xlu0 %1387
        %1389 = vrot.lane.b32.xlu0 %v1382, 48
        %v1390 = vpop.permute.xlu0 %1389
        %1391 = vrot.lane.b32.xlu0 %v1383, 48
        %v1392 = vpop.permute.xlu0 %1391
        %v1393 = vsel %vm341, %v1388, %v1390
        %v1394 = vsel %vm341, %v1390, %v1392
        %v1397 = vadd.f32 %v1378, %v1393
        %v1398 = vadd.f32 %v1379, %v1394
        %v1399 = vstv %s281
        %v1400 = vmul.f32 %v1399, %v346
        %v1401 = vmul.f32 %v1399, %v342
        %v1402 = vmul.f32 %v1399, %v347
        %1406 = vrot.lane.b32.xlu0 %v1400, 32
        %v1407 = vpop.permute.xlu0 %1406
        %1408 = vrot.lane.b32.xlu0 %v1401, 32
        %v1409 = vpop.permute.xlu0 %1408
        %1410 = vrot.lane.b32.xlu0 %v1402, 32
        %v1411 = vpop.permute.xlu0 %1410
        %v1412 = vsel %vm577, %v1407, %v1409
        %v1413 = vsel %vm577, %v1409, %v1411
        %v1416 = vadd.f32 %v1397, %v1412
        %v1417 = vadd.f32 %v1398, %v1413
        %v1418 = vstv %s330
        %v1419 = vmul.f32 %v1418, %v358
        %v1420 = vmul.f32 %v1418, %v354
        %v1421 = vmul.f32 %v1418, %v359
        %1425 = vrot.lane.b32.xlu0 %v1419, 32
        %v1426 = vpop.permute.xlu0 %1425
        %1427 = vrot.lane.b32.xlu0 %v1420, 32
        %v1428 = vpop.permute.xlu0 %1427
        %1429 = vrot.lane.b32.xlu0 %v1421, 32
        %v1430 = vpop.permute.xlu0 %1429
        %v1431 = vsel %vm577, %v1426, %v1428
        %v1432 = vsel %vm577, %v1428, %v1430
        %v1435 = vadd.f32 %v1416, %v1431
        %v1436 = vadd.f32 %v1417, %v1432
        %v1439 = vcombine.low %v1435, %v1436
        %v1441 = vunpack.c.l.s4 1966171168
        %v1442 = vunpack.c.0.s8 %v1441
        %v1443 = vlaneseq
        %v1444 = vshrl.u32 %v1443, 7
        %v1445 = vsub.s32 %v1442, %v1444
        %v1446 = vrot.slane %v1439, %v1445
        %v1448 = vunpack.c.l.s4 1966171168
        %v1449 = vunpack.c.0.s8 %v1448
        %v1450 = vlaneseq
        %v1451 = vshrl.u32 %v1450, 7
        %v1452 = vsub.s32 %v1449, %v1451
        %v1453 = vrot.slane %v1446, %v1452
        %v1455 = vadd.f32 %v1198, %v1453
        %v1456 = vstv %s240
        %v1457 = vmul.f32 %v1456, %v346
        %v1458 = vmul.f32 %v1456, %v342
        %v1459 = vadd.f32 %v1457, 0.0
        %v1460 = vadd.f32 %v1458, 0.0
        %v1461 = vstv %s289
        %v1462 = vmul.f32 %v1461, %v358
        %v1463 = vmul.f32 %v1461, %v354
        %v1464 = vadd.f32 %v1459, %v1462
        %v1465 = vadd.f32 %v1460, %v1463
        %v1466 = vstv %s247
        %v1467 = vmul.f32 %v1466, %v346
        %v1468 = vmul.f32 %v1466, %v342
        %v1469 = vmul.f32 %v1466, %v347
        %1473 = vrot.lane.b32.xlu0 %v1467, 112
        %v1474 = vpop.permute.xlu0 %1473
        %1475 = vrot.lane.b32.xlu0 %v1468, 112
        %v1476 = vpop.permute.xlu0 %1475
        %1477 = vrot.lane.b32.xlu0 %v1469, 112
        %v1478 = vpop.permute.xlu0 %1477
        %v1479 = vsel %vm383, %v1474, %v1476
        %v1480 = vsel %vm383, %v1476, %v1478
        %v1483 = vadd.f32 %v1464, %v1479
        %v1484 = vadd.f32 %v1465, %v1480
        %v1485 = vstv %s296
        %v1486 = vmul.f32 %v1485, %v358
        %v1487 = vmul.f32 %v1485, %v354
        %v1488 = vmul.f32 %v1485, %v359
        %1492 = vrot.lane.b32.xlu0 %v1486, 112
        %v1493 = vpop.permute.xlu0 %1492
        %1494 = vrot.lane.b32.xlu0 %v1487, 112
        %v1495 = vpop.permute.xlu0 %1494
        %1496 = vrot.lane.b32.xlu0 %v1488, 112
        %v1497 = vpop.permute.xlu0 %1496
        %v1498 = vsel %vm383, %v1493, %v1495
        %v1499 = vsel %vm383, %v1495, %v1497
        %v1502 = vadd.f32 %v1483, %v1498
        %v1503 = vadd.f32 %v1484, %v1499
        %v1504 = vstv %s254
        %v1505 = vmul.f32 %v1504, %v346
        %v1506 = vmul.f32 %v1504, %v342
        %v1507 = vmul.f32 %v1504, %v347
        %1511 = vrot.lane.b32.xlu0 %v1505, 96
        %v1512 = vpop.permute.xlu0 %1511
        %1513 = vrot.lane.b32.xlu0 %v1506, 96
        %v1514 = vpop.permute.xlu0 %1513
        %1515 = vrot.lane.b32.xlu0 %v1507, 96
        %v1516 = vpop.permute.xlu0 %1515
        %v1517 = vsel %vm422, %v1512, %v1514
        %v1518 = vsel %vm422, %v1514, %v1516
        %v1521 = vadd.f32 %v1502, %v1517
        %v1522 = vadd.f32 %v1503, %v1518
        %v1523 = vstv %s303
        %v1524 = vmul.f32 %v1523, %v358
        %v1525 = vmul.f32 %v1523, %v354
        %v1526 = vmul.f32 %v1523, %v359
        %1530 = vrot.lane.b32.xlu0 %v1524, 96
        %v1531 = vpop.permute.xlu0 %1530
        %1532 = vrot.lane.b32.xlu0 %v1525, 96
        %v1533 = vpop.permute.xlu0 %1532
        %1534 = vrot.lane.b32.xlu0 %v1526, 96
        %v1535 = vpop.permute.xlu0 %1534
        %v1536 = vsel %vm422, %v1531, %v1533
        %v1537 = vsel %vm422, %v1533, %v1535
        %v1540 = vadd.f32 %v1521, %v1536
        %v1541 = vadd.f32 %v1522, %v1537
        %v1542 = vstv %s261
        %v1543 = vmul.f32 %v1542, %v346
        %v1544 = vmul.f32 %v1542, %v342
        %v1545 = vmul.f32 %v1542, %v347
        %1549 = vrot.lane.b32.xlu0 %v1543, 80
        %v1550 = vpop.permute.xlu0 %1549
        %1551 = vrot.lane.b32.xlu0 %v1544, 80
        %v1552 = vpop.permute.xlu0 %1551
        %1553 = vrot.lane.b32.xlu0 %v1545, 80
        %v1554 = vpop.permute.xlu0 %1553
        %v1555 = vsel %vm461, %v1550, %v1552
        %v1556 = vsel %vm461, %v1552, %v1554
        %v1559 = vadd.f32 %v1540, %v1555
        %v1560 = vadd.f32 %v1541, %v1556
        %v1561 = vstv %s310
        %v1562 = vmul.f32 %v1561, %v358
        %v1563 = vmul.f32 %v1561, %v354
        %v1564 = vmul.f32 %v1561, %v359
        %1568 = vrot.lane.b32.xlu0 %v1562, 80
        %v1569 = vpop.permute.xlu0 %1568
        %1570 = vrot.lane.b32.xlu0 %v1563, 80
        %v1571 = vpop.permute.xlu0 %1570
        %1572 = vrot.lane.b32.xlu0 %v1564, 80
        %v1573 = vpop.permute.xlu0 %1572
        %v1574 = vsel %vm461, %v1569, %v1571
        %v1575 = vsel %vm461, %v1571, %v1573
        %v1578 = vadd.f32 %v1559, %v1574
        %v1579 = vadd.f32 %v1560, %v1575
        %v1580 = vstv %s268
        %v1581 = vmul.f32 %v1580, %v346
        %v1582 = vmul.f32 %v1580, %v342
        %v1583 = vmul.f32 %v1580, %v347
        %1587 = vrot.lane.b32.xlu0 %v1581, 64
        %v1588 = vpop.permute.xlu0 %1587
        %1589 = vrot.lane.b32.xlu0 %v1582, 64
        %v1590 = vpop.permute.xlu0 %1589
        %1591 = vrot.lane.b32.xlu0 %v1583, 64
        %v1592 = vpop.permute.xlu0 %1591
        %v1593 = vsel %vm500, %v1588, %v1590
        %v1594 = vsel %vm500, %v1590, %v1592
        %v1597 = vadd.f32 %v1578, %v1593
        %v1598 = vadd.f32 %v1579, %v1594
        %v1599 = vstv %s317
        %v1600 = vmul.f32 %v1599, %v358
        %v1601 = vmul.f32 %v1599, %v354
        %v1602 = vmul.f32 %v1599, %v359
        %1606 = vrot.lane.b32.xlu0 %v1600, 64
        %v1607 = vpop.permute.xlu0 %1606
        %1608 = vrot.lane.b32.xlu0 %v1601, 64
        %v1609 = vpop.permute.xlu0 %1608
        %1610 = vrot.lane.b32.xlu0 %v1602, 64
        %v1611 = vpop.permute.xlu0 %1610
        %v1612 = vsel %vm500, %v1607, %v1609
        %v1613 = vsel %vm500, %v1609, %v1611
        %v1616 = vadd.f32 %v1597, %v1612
        %v1617 = vadd.f32 %v1598, %v1613
        %v1618 = vstv %s275
        %v1619 = vmul.f32 %v1618, %v346
        %v1620 = vmul.f32 %v1618, %v342
        %v1621 = vmul.f32 %v1618, %v347
        %1625 = vrot.lane.b32.xlu0 %v1619, 48
        %v1626 = vpop.permute.xlu0 %1625
        %1627 = vrot.lane.b32.xlu0 %v1620, 48
        %v1628 = vpop.permute.xlu0 %1627
        %1629 = vrot.lane.b32.xlu0 %v1621, 48
        %v1630 = vpop.permute.xlu0 %1629
        %v1631 = vsel %vm341, %v1626, %v1628
        %v1632 = vsel %vm341, %v1628, %v1630
        %v1635 = vadd.f32 %v1616, %v1631
        %v1636 = vadd.f32 %v1617, %v1632
        %v1637 = vstv %s324
        %v1638 = vmul.f32 %v1637, %v358
        %v1639 = vmul.f32 %v1637, %v354
        %v1640 = vmul.f32 %v1637, %v359
        %1644 = vrot.lane.b32.xlu0 %v1638, 48
        %v1645 = vpop.permute.xlu0 %1644
        %1646 = vrot.lane.b32.xlu0 %v1639, 48
        %v1647 = vpop.permute.xlu0 %1646
        %1648 = vrot.lane.b32.xlu0 %v1640, 48
        %v1649 = vpop.permute.xlu0 %1648
        %v1650 = vsel %vm341, %v1645, %v1647
        %v1651 = vsel %vm341, %v1647, %v1649
        %v1654 = vadd.f32 %v1635, %v1650
        %v1655 = vadd.f32 %v1636, %v1651
        %v1656 = vstv %s282
        %v1657 = vmul.f32 %v1656, %v346
        %v1658 = vmul.f32 %v1656, %v342
        %v1659 = vmul.f32 %v1656, %v347
        %1663 = vrot.lane.b32.xlu0 %v1657, 32
        %v1664 = vpop.permute.xlu0 %1663
        %1665 = vrot.lane.b32.xlu0 %v1658, 32
        %v1666 = vpop.permute.xlu0 %1665
        %1667 = vrot.lane.b32.xlu0 %v1659, 32
        %v1668 = vpop.permute.xlu0 %1667
        %v1669 = vsel %vm577, %v1664, %v1666
        %v1670 = vsel %vm577, %v1666, %v1668
        %v1673 = vadd.f32 %v1654, %v1669
        %v1674 = vadd.f32 %v1655, %v1670
        %v1675 = vstv %s331
        %v1676 = vmul.f32 %v1675, %v358
        %v1677 = vmul.f32 %v1675, %v354
        %v1678 = vmul.f32 %v1675, %v359
        %1682 = vrot.lane.b32.xlu0 %v1676, 32
        %v1683 = vpop.permute.xlu0 %1682
        %1684 = vrot.lane.b32.xlu0 %v1677, 32
        %v1685 = vpop.permute.xlu0 %1684
        %1686 = vrot.lane.b32.xlu0 %v1678, 32
        %v1687 = vpop.permute.xlu0 %1686
        %v1688 = vsel %vm577, %v1683, %v1685
        %v1689 = vsel %vm577, %v1685, %v1687
        %v1692 = vadd.f32 %v1673, %v1688
        %v1693 = vadd.f32 %v1674, %v1689
        %1696 = vrot.lane.b32.xlu0 %v1692, 3
        %v1697 = vpop.permute.xlu0 %1696
        %1698 = vrot.lane.b32.xlu0 %v1693, 3
        %v1699 = vpop.permute.xlu0 %1698
        %v1700 = vsel %vm609, %v1697, %v1699
        %v1703 = vsel %vm609, 0.0, %v1697
        %v1704 = vsel %vm609, %v1699, 0.0
        %vm1705 = vcmp.lt.s32.totalorder %v334, 15
        %v1708 = vcombine.low %v1703, %v1700
        %v1710 = vunpack.c.l.s4 1966171168
        %v1711 = vunpack.c.0.s8 %v1710
        %v1712 = vlaneseq
        %v1713 = vshrl.u32 %v1712, 7
        %v1714 = vsub.s32 %v1711, %v1713
        %v1715 = vrot.slane %v1708, %v1714
        %v1717 = vunpack.c.l.s4 1966171168
        %v1718 = vunpack.c.0.s8 %v1717
        %v1719 = vlaneseq
        %v1720 = vshrl.u32 %v1719, 7
        %v1721 = vsub.s32 %v1718, %v1720
        %v1722 = vrot.slane %v1704, %v1721
        %v1723 = vcombine.low %v1715, %v1722
        %v1725 = vunpack.c.l.s4 1966171168
        %v1726 = vunpack.c.0.s8 %v1725
        %v1727 = vlaneseq
        %v1728 = vshrl.u32 %v1727, 7
        %v1729 = vsub.s32 %v1726, %v1728
        %v1730 = vrot.slane %v1723, %v1729
        %1731 = vrot.lane.b32.xlu0 %v1730, 124
        %v1732 = vpop.permute.xlu0 %1731
        %v1733 = vrot.slane %v1732, 1
        %vm1734 = vcmask 1014784
        %v1735 = vsel %vm1734, %v1732, %v1733
        %v1737 = vsel %vm1705, %v1735, 0.0
        %v1738 = vadd.f32 %v1455, %v1737
        %v1739 = vstv %s241
        %v1740 = vmul.f32 %v1739, %v346
        %v1741 = vmul.f32 %v1739, %v342
        %v1742 = vadd.f32 %v1740, 0.0
        %v1743 = vadd.f32 %v1741, 0.0
        %v1744 = vstv %s290
        %v1745 = vmul.f32 %v1744, %v358
        %v1746 = vmul.f32 %v1744, %v354
        %v1747 = vadd.f32 %v1742, %v1745
        %v1748 = vadd.f32 %v1743, %v1746
        %v1749 = vstv %s248
        %v1750 = vmul.f32 %v1749, %v346
        %v1751 = vmul.f32 %v1749, %v342
        %v1752 = vmul.f32 %v1749, %v347
        %1756 = vrot.lane.b32.xlu0 %v1750, 112
        %v1757 = vpop.permute.xlu0 %1756
        %1758 = vrot.lane.b32.xlu0 %v1751, 112
        %v1759 = vpop.permute.xlu0 %1758
        %1760 = vrot.lane.b32.xlu0 %v1752, 112
        %v1761 = vpop.permute.xlu0 %1760
        %v1762 = vsel %vm383, %v1757, %v1759
        %v1763 = vsel %vm383, %v1759, %v1761
        %v1766 = vadd.f32 %v1747, %v1762
        %v1767 = vadd.f32 %v1748, %v1763
        %v1768 = vstv %s297
        %v1769 = vmul.f32 %v1768, %v358
        %v1770 = vmul.f32 %v1768, %v354
        %v1771 = vmul.f32 %v1768, %v359
        %1775 = vrot.lane.b32.xlu0 %v1769, 112
        %v1776 = vpop.permute.xlu0 %1775
        %1777 = vrot.lane.b32.xlu0 %v1770, 112
        %v1778 = vpop.permute.xlu0 %1777
        %1779 = vrot.lane.b32.xlu0 %v1771, 112
        %v1780 = vpop.permute.xlu0 %1779
        %v1781 = vsel %vm383, %v1776, %v1778
        %v1782 = vsel %vm383, %v1778, %v1780
        %v1785 = vadd.f32 %v1766, %v1781
        %v1786 = vadd.f32 %v1767, %v1782
        %v1787 = vstv %s255
        %v1788 = vmul.f32 %v1787, %v346
        %v1789 = vmul.f32 %v1787, %v342
        %v1790 = vmul.f32 %v1787, %v347
        %1794 = vrot.lane.b32.xlu0 %v1788, 96
        %v1795 = vpop.permute.xlu0 %1794
        %1796 = vrot.lane.b32.xlu0 %v1789, 96
        %v1797 = vpop.permute.xlu0 %1796
        %1798 = vrot.lane.b32.xlu0 %v1790, 96
        %v1799 = vpop.permute.xlu0 %1798
        %v1800 = vsel %vm422, %v1795, %v1797
        %v1801 = vsel %vm422, %v1797, %v1799
        %v1804 = vadd.f32 %v1785, %v1800
        %v1805 = vadd.f32 %v1786, %v1801
        %v1806 = vstv %s304
        %v1807 = vmul.f32 %v1806, %v358
        %v1808 = vmul.f32 %v1806, %v354
        %v1809 = vmul.f32 %v1806, %v359
        %1813 = vrot.lane.b32.xlu0 %v1807, 96
        %v1814 = vpop.permute.xlu0 %1813
        %1815 = vrot.lane.b32.xlu0 %v1808, 96
        %v1816 = vpop.permute.xlu0 %1815
        %1817 = vrot.lane.b32.xlu0 %v1809, 96
        %v1818 = vpop.permute.xlu0 %1817
        %v1819 = vsel %vm422, %v1814, %v1816
        %v1820 = vsel %vm422, %v1816, %v1818
        %v1823 = vadd.f32 %v1804, %v1819
        %v1824 = vadd.f32 %v1805, %v1820
        %v1825 = vstv %s262
        %v1826 = vmul.f32 %v1825, %v346
        %v1827 = vmul.f32 %v1825, %v342
        %v1828 = vmul.f32 %v1825, %v347
        %1832 = vrot.lane.b32.xlu0 %v1826, 80
        %v1833 = vpop.permute.xlu0 %1832
        %1834 = vrot.lane.b32.xlu0 %v1827, 80
        %v1835 = vpop.permute.xlu0 %1834
        %1836 = vrot.lane.b32.xlu0 %v1828, 80
        %v1837 = vpop.permute.xlu0 %1836
        %v1838 = vsel %vm461, %v1833, %v1835
        %v1839 = vsel %vm461, %v1835, %v1837
        %v1842 = vadd.f32 %v1823, %v1838
        %v1843 = vadd.f32 %v1824, %v1839
        %v1844 = vstv %s311
        %v1845 = vmul.f32 %v1844, %v358
        %v1846 = vmul.f32 %v1844, %v354
        %v1847 = vmul.f32 %v1844, %v359
        %1851 = vrot.lane.b32.xlu0 %v1845, 80
        %v1852 = vpop.permute.xlu0 %1851
        %1853 = vrot.lane.b32.xlu0 %v1846, 80
        %v1854 = vpop.permute.xlu0 %1853
        %1855 = vrot.lane.b32.xlu0 %v1847, 80
        %v1856 = vpop.permute.xlu0 %1855
        %v1857 = vsel %vm461, %v1852, %v1854
        %v1858 = vsel %vm461, %v1854, %v1856
        %v1861 = vadd.f32 %v1842, %v1857
        %v1862 = vadd.f32 %v1843, %v1858
        %v1863 = vstv %s269
        %v1864 = vmul.f32 %v1863, %v346
        %v1865 = vmul.f32 %v1863, %v342
        %v1866 = vmul.f32 %v1863, %v347
        %1870 = vrot.lane.b32.xlu0 %v1864, 64
        %v1871 = vpop.permute.xlu0 %1870
        %1872 = vrot.lane.b32.xlu0 %v1865, 64
        %v1873 = vpop.permute.xlu0 %1872
        %1874 = vrot.lane.b32.xlu0 %v1866, 64
        %v1875 = vpop.permute.xlu0 %1874
        %v1876 = vsel %vm500, %v1871, %v1873
        %v1877 = vsel %vm500, %v1873, %v1875
        %v1880 = vadd.f32 %v1861, %v1876
        %v1881 = vadd.f32 %v1862, %v1877
        %v1882 = vstv %s318
        %v1883 = vmul.f32 %v1882, %v358
        %v1884 = vmul.f32 %v1882, %v354
        %v1885 = vmul.f32 %v1882, %v359
        %1889 = vrot.lane.b32.xlu0 %v1883, 64
        %v1890 = vpop.permute.xlu0 %1889
        %1891 = vrot.lane.b32.xlu0 %v1884, 64
        %v1892 = vpop.permute.xlu0 %1891
        %1893 = vrot.lane.b32.xlu0 %v1885, 64
        %v1894 = vpop.permute.xlu0 %1893
        %v1895 = vsel %vm500, %v1890, %v1892
        %v1896 = vsel %vm500, %v1892, %v1894
        %v1899 = vadd.f32 %v1880, %v1895
        %v1900 = vadd.f32 %v1881, %v1896
        %v1901 = vstv %s276
        %v1902 = vmul.f32 %v1901, %v346
        %v1903 = vmul.f32 %v1901, %v342
        %v1904 = vmul.f32 %v1901, %v347
        %1908 = vrot.lane.b32.xlu0 %v1902, 48
        %v1909 = vpop.permute.xlu0 %1908
        %1910 = vrot.lane.b32.xlu0 %v1903, 48
        %v1911 = vpop.permute.xlu0 %1910
        %1912 = vrot.lane.b32.xlu0 %v1904, 48
        %v1913 = vpop.permute.xlu0 %1912
        %v1914 = vsel %vm341, %v1909, %v1911
        %v1915 = vsel %vm341, %v1911, %v1913
        %v1918 = vadd.f32 %v1899, %v1914
        %v1919 = vadd.f32 %v1900, %v1915
        %v1920 = vstv %s325
        %v1921 = vmul.f32 %v1920, %v358
        %v1922 = vmul.f32 %v1920, %v354
        %v1923 = vmul.f32 %v1920, %v359
        %1927 = vrot.lane.b32.xlu0 %v1921, 48
        %v1928 = vpop.permute.xlu0 %1927
        %1929 = vrot.lane.b32.xlu0 %v1922, 48
        %v1930 = vpop.permute.xlu0 %1929
        %1931 = vrot.lane.b32.xlu0 %v1923, 48
        %v1932 = vpop.permute.xlu0 %1931
        %v1933 = vsel %vm341, %v1928, %v1930
        %v1934 = vsel %vm341, %v1930, %v1932
        %v1937 = vadd.f32 %v1918, %v1933
        %v1938 = vadd.f32 %v1919, %v1934
        %v1939 = vstv %s283
        %v1940 = vmul.f32 %v1939, %v346
        %v1941 = vmul.f32 %v1939, %v342
        %v1942 = vmul.f32 %v1939, %v347
        %1946 = vrot.lane.b32.xlu0 %v1940, 32
        %v1947 = vpop.permute.xlu0 %1946
        %1948 = vrot.lane.b32.xlu0 %v1941, 32
        %v1949 = vpop.permute.xlu0 %1948
        %1950 = vrot.lane.b32.xlu0 %v1942, 32
        %v1951 = vpop.permute.xlu0 %1950
        %v1952 = vsel %vm577, %v1947, %v1949
        %v1953 = vsel %vm577, %v1949, %v1951
        %v1956 = vadd.f32 %v1937, %v1952
        %v1957 = vadd.f32 %v1938, %v1953
        %v1958 = vstv %s332
        %v1959 = vmul.f32 %v1958, %v358
        %v1960 = vmul.f32 %v1958, %v354
        %v1961 = vmul.f32 %v1958, %v359
        %1965 = vrot.lane.b32.xlu0 %v1959, 32
        %v1966 = vpop.permute.xlu0 %1965
        %1967 = vrot.lane.b32.xlu0 %v1960, 32
        %v1968 = vpop.permute.xlu0 %1967
        %1969 = vrot.lane.b32.xlu0 %v1961, 32
        %v1970 = vpop.permute.xlu0 %1969
        %v1971 = vsel %vm577, %v1966, %v1968
        %v1972 = vsel %vm577, %v1968, %v1970
        %v1975 = vadd.f32 %v1956, %v1971
        %v1976 = vadd.f32 %v1957, %v1972
        %1979 = vrot.lane.b32.xlu0 %v1975, 3
        %v1980 = vpop.permute.xlu0 %1979
        %1981 = vrot.lane.b32.xlu0 %v1976, 3
        %v1982 = vpop.permute.xlu0 %1981
        %v1983 = vsel %vm609, %v1980, %v1982
        %v1986 = vsel %vm609, 0.0, %v1980
        %v1987 = vsel %vm609, %v1982, 0.0
        %vm1988 = vcmp.lt.s32.totalorder %v334, 14
        %v1991 = vcombine.low %v1986, %v1983
        %v1993 = vunpack.c.l.s4 1966171168
        %v1994 = vunpack.c.0.s8 %v1993
        %v1995 = vlaneseq
        %v1996 = vshrl.u32 %v1995, 7
        %v1997 = vsub.s32 %v1994, %v1996
        %v1998 = vrot.slane %v1991, %v1997
        %v2000 = vunpack.c.l.s4 1966171168
        %v2001 = vunpack.c.0.s8 %v2000
        %v2002 = vlaneseq
        %v2003 = vshrl.u32 %v2002, 7
        %v2004 = vsub.s32 %v2001, %v2003
        %v2005 = vrot.slane %v1987, %v2004
        %v2006 = vcombine.low %v1998, %v2005
        %v2008 = vunpack.c.l.s4 1966171168
        %v2009 = vunpack.c.0.s8 %v2008
        %v2010 = vlaneseq
        %v2011 = vshrl.u32 %v2010, 7
        %v2012 = vsub.s32 %v2009, %v2011
        %v2013 = vrot.slane %v2006, %v2012
        %2014 = vrot.lane.b32.xlu0 %v2013, 123
        %v2015 = vpop.permute.xlu0 %2014
        %v2016 = vrot.slane %v2015, 1
        %vm2017 = vcmask 1006592
        %v2018 = vsel %vm2017, %v2015, %v2016
        %v2020 = vsel %vm1988, %v2018, 0.0
        %v2021 = vadd.f32 %v1738, %v2020
        %v2022 = vstv %s242
        %v2023 = vmul.f32 %v2022, %v346
        %v2024 = vmul.f32 %v2022, %v342
        %v2025 = vadd.f32 %v2023, 0.0
        %v2026 = vadd.f32 %v2024, 0.0
        %v2027 = vstv %s291
        %v2028 = vmul.f32 %v2027, %v358
        %v2029 = vmul.f32 %v2027, %v354
        %v2030 = vadd.f32 %v2025, %v2028
        %v2031 = vadd.f32 %v2026, %v2029
        %v2032 = vstv %s249
        %v2033 = vmul.f32 %v2032, %v346
        %v2034 = vmul.f32 %v2032, %v342
        %v2035 = vmul.f32 %v2032, %v347
        %2039 = vrot.lane.b32.xlu0 %v2033, 112
        %v2040 = vpop.permute.xlu0 %2039
        %2041 = vrot.lane.b32.xlu0 %v2034, 112
        %v2042 = vpop.permute.xlu0 %2041
        %2043 = vrot.lane.b32.xlu0 %v2035, 112
        %v2044 = vpop.permute.xlu0 %2043
        %v2045 = vsel %vm383, %v2040, %v2042
        %v2046 = vsel %vm383, %v2042, %v2044
        %v2049 = vadd.f32 %v2030, %v2045
        %v2050 = vadd.f32 %v2031, %v2046
        %v2051 = vstv %s298
        %v2052 = vmul.f32 %v2051, %v358
        %v2053 = vmul.f32 %v2051, %v354
        %v2054 = vmul.f32 %v2051, %v359
        %2058 = vrot.lane.b32.xlu0 %v2052, 112
        %v2059 = vpop.permute.xlu0 %2058
        %2060 = vrot.lane.b32.xlu0 %v2053, 112
        %v2061 = vpop.permute.xlu0 %2060
        %2062 = vrot.lane.b32.xlu0 %v2054, 112
        %v2063 = vpop.permute.xlu0 %2062
        %v2064 = vsel %vm383, %v2059, %v2061
        %v2065 = vsel %vm383, %v2061, %v2063
        %v2068 = vadd.f32 %v2049, %v2064
        %v2069 = vadd.f32 %v2050, %v2065
        %v2070 = vstv %s256
        %v2071 = vmul.f32 %v2070, %v346
        %v2072 = vmul.f32 %v2070, %v342
        %v2073 = vmul.f32 %v2070, %v347
        %2077 = vrot.lane.b32.xlu0 %v2071, 96
        %v2078 = vpop.permute.xlu0 %2077
        %2079 = vrot.lane.b32.xlu0 %v2072, 96
        %v2080 = vpop.permute.xlu0 %2079
        %2081 = vrot.lane.b32.xlu0 %v2073, 96
        %v2082 = vpop.permute.xlu0 %2081
        %v2083 = vsel %vm422, %v2078, %v2080
        %v2084 = vsel %vm422, %v2080, %v2082
        %v2087 = vadd.f32 %v2068, %v2083
        %v2088 = vadd.f32 %v2069, %v2084
        %v2089 = vstv %s305
        %v2090 = vmul.f32 %v2089, %v358
        %v2091 = vmul.f32 %v2089, %v354
        %v2092 = vmul.f32 %v2089, %v359
        %2096 = vrot.lane.b32.xlu0 %v2090, 96
        %v2097 = vpop.permute.xlu0 %2096
        %2098 = vrot.lane.b32.xlu0 %v2091, 96
        %v2099 = vpop.permute.xlu0 %2098
        %2100 = vrot.lane.b32.xlu0 %v2092, 96
        %v2101 = vpop.permute.xlu0 %2100
        %v2102 = vsel %vm422, %v2097, %v2099
        %v2103 = vsel %vm422, %v2099, %v2101
        %v2106 = vadd.f32 %v2087, %v2102
        %v2107 = vadd.f32 %v2088, %v2103
        %v2108 = vstv %s263
        %v2109 = vmul.f32 %v2108, %v346
        %v2110 = vmul.f32 %v2108, %v342
        %v2111 = vmul.f32 %v2108, %v347
        %2115 = vrot.lane.b32.xlu0 %v2109, 80
        %v2116 = vpop.permute.xlu0 %2115
        %2117 = vrot.lane.b32.xlu0 %v2110, 80
        %v2118 = vpop.permute.xlu0 %2117
        %2119 = vrot.lane.b32.xlu0 %v2111, 80
        %v2120 = vpop.permute.xlu0 %2119
        %v2121 = vsel %vm461, %v2116, %v2118
        %v2122 = vsel %vm461, %v2118, %v2120
        %v2125 = vadd.f32 %v2106, %v2121
        %v2126 = vadd.f32 %v2107, %v2122
        %v2127 = vstv %s312
        %v2128 = vmul.f32 %v2127, %v358
        %v2129 = vmul.f32 %v2127, %v354
        %v2130 = vmul.f32 %v2127, %v359
        %2134 = vrot.lane.b32.xlu0 %v2128, 80
        %v2135 = vpop.permute.xlu0 %2134
        %2136 = vrot.lane.b32.xlu0 %v2129, 80
        %v2137 = vpop.permute.xlu0 %2136
        %2138 = vrot.lane.b32.xlu0 %v2130, 80
        %v2139 = vpop.permute.xlu0 %2138
        %v2140 = vsel %vm461, %v2135, %v2137
        %v2141 = vsel %vm461, %v2137, %v2139
        %v2144 = vadd.f32 %v2125, %v2140
        %v2145 = vadd.f32 %v2126, %v2141
        %v2146 = vstv %s270
        %v2147 = vmul.f32 %v2146, %v346
        %v2148 = vmul.f32 %v2146, %v342
        %v2149 = vmul.f32 %v2146, %v347
        %2153 = vrot.lane.b32.xlu0 %v2147, 64
        %v2154 = vpop.permute.xlu0 %2153
        %2155 = vrot.lane.b32.xlu0 %v2148, 64
        %v2156 = vpop.permute.xlu0 %2155
        %2157 = vrot.lane.b32.xlu0 %v2149, 64
        %v2158 = vpop.permute.xlu0 %2157
        %v2159 = vsel %vm500, %v2154, %v2156
        %v2160 = vsel %vm500, %v2156, %v2158
        %v2163 = vadd.f32 %v2144, %v2159
        %v2164 = vadd.f32 %v2145, %v2160
        %v2165 = vstv %s319
        %v2166 = vmul.f32 %v2165, %v358
        %v2167 = vmul.f32 %v2165, %v354
        %v2168 = vmul.f32 %v2165, %v359
        %2172 = vrot.lane.b32.xlu0 %v2166, 64
        %v2173 = vpop.permute.xlu0 %2172
        %2174 = vrot.lane.b32.xlu0 %v2167, 64
        %v2175 = vpop.permute.xlu0 %2174
        %2176 = vrot.lane.b32.xlu0 %v2168, 64
        %v2177 = vpop.permute.xlu0 %2176
        %v2178 = vsel %vm500, %v2173, %v2175
        %v2179 = vsel %vm500, %v2175, %v2177
        %v2182 = vadd.f32 %v2163, %v2178
        %v2183 = vadd.f32 %v2164, %v2179
        %v2184 = vstv %s277
        %v2185 = vmul.f32 %v2184, %v346
        %v2186 = vmul.f32 %v2184, %v342
        %v2187 = vmul.f32 %v2184, %v347
        %2191 = vrot.lane.b32.xlu0 %v2185, 48
        %v2192 = vpop.permute.xlu0 %2191
        %2193 = vrot.lane.b32.xlu0 %v2186, 48
        %v2194 = vpop.permute.xlu0 %2193
        %2195 = vrot.lane.b32.xlu0 %v2187, 48
        %v2196 = vpop.permute.xlu0 %2195
        %v2197 = vsel %vm341, %v2192, %v2194
        %v2198 = vsel %vm341, %v2194, %v2196
        %v2201 = vadd.f32 %v2182, %v2197
        %v2202 = vadd.f32 %v2183, %v2198
        %v2203 = vstv %s326
        %v2204 = vmul.f32 %v2203, %v358
        %v2205 = vmul.f32 %v2203, %v354
        %v2206 = vmul.f32 %v2203, %v359
        %2210 = vrot.lane.b32.xlu0 %v2204, 48
        %v2211 = vpop.permute.xlu0 %2210
        %2212 = vrot.lane.b32.xlu0 %v2205, 48
        %v2213 = vpop.permute.xlu0 %2212
        %2214 = vrot.lane.b32.xlu0 %v2206, 48
        %v2215 = vpop.permute.xlu0 %2214
        %v2216 = vsel %vm341, %v2211, %v2213
        %v2217 = vsel %vm341, %v2213, %v2215
        %v2220 = vadd.f32 %v2201, %v2216
        %v2221 = vadd.f32 %v2202, %v2217
        %v2222 = vstv %s284
        %v2223 = vmul.f32 %v2222, %v346
        %v2224 = vmul.f32 %v2222, %v342
        %v2225 = vmul.f32 %v2222, %v347
        %2229 = vrot.lane.b32.xlu0 %v2223, 32
        %v2230 = vpop.permute.xlu0 %2229
        %2231 = vrot.lane.b32.xlu0 %v2224, 32
        %v2232 = vpop.permute.xlu0 %2231
        %2233 = vrot.lane.b32.xlu0 %v2225, 32
        %v2234 = vpop.permute.xlu0 %2233
        %v2235 = vsel %vm577, %v2230, %v2232
        %v2236 = vsel %vm577, %v2232, %v2234
        %v2239 = vadd.f32 %v2220, %v2235
        %v2240 = vadd.f32 %v2221, %v2236
        %v2241 = vstv %s333
        %v2242 = vmul.f32 %v2241, %v358
        %v2243 = vmul.f32 %v2241, %v354
        %v2244 = vmul.f32 %v2241, %v359
        %2248 = vrot.lane.b32.xlu0 %v2242, 32
        %v2249 = vpop.permute.xlu0 %2248
        %2250 = vrot.lane.b32.xlu0 %v2243, 32
        %v2251 = vpop.permute.xlu0 %2250
        %2252 = vrot.lane.b32.xlu0 %v2244, 32
        %v2253 = vpop.permute.xlu0 %2252
        %v2254 = vsel %vm577, %v2249, %v2251
        %v2255 = vsel %vm577, %v2251, %v2253
        %v2258 = vadd.f32 %v2239, %v2254
        %v2259 = vadd.f32 %v2240, %v2255
        %2262 = vrot.lane.b32.xlu0 %v2258, 3
        %v2263 = vpop.permute.xlu0 %2262
        %2264 = vrot.lane.b32.xlu0 %v2259, 3
        %v2265 = vpop.permute.xlu0 %2264
        %v2266 = vsel %vm609, %v2263, %v2265
        %v2269 = vsel %vm609, 0.0, %v2263
        %v2270 = vsel %vm609, %v2265, 0.0
        %vm2271 = vcmp.lt.s32.totalorder %v334, 13
        %v2274 = vcombine.low %v2269, %v2266
        %v2276 = vunpack.c.l.s4 1966171168
        %v2277 = vunpack.c.0.s8 %v2276
        %v2278 = vlaneseq
        %v2279 = vshrl.u32 %v2278, 7
        %v2280 = vsub.s32 %v2277, %v2279
        %v2281 = vrot.slane %v2274, %v2280
        %v2283 = vunpack.c.l.s4 1966171168
        %v2284 = vunpack.c.0.s8 %v2283
        %v2285 = vlaneseq
        %v2286 = vshrl.u32 %v2285, 7
        %v2287 = vsub.s32 %v2284, %v2286
        %v2288 = vrot.slane %v2270, %v2287
        %v2289 = vcombine.low %v2281, %v2288
        %v2291 = vunpack.c.l.s4 1966171168
        %v2292 = vunpack.c.0.s8 %v2291
        %v2293 = vlaneseq
        %v2294 = vshrl.u32 %v2293, 7
        %v2295 = vsub.s32 %v2292, %v2294
        %v2296 = vrot.slane %v2289, %v2295
        %2297 = vrot.lane.b32.xlu0 %v2296, 122
        %v2298 = vpop.permute.xlu0 %2297
        %v2299 = vrot.slane %v2298, 1
        %vm2300 = vcmask 998400
        %v2301 = vsel %vm2300, %v2298, %v2299
        %v2303 = vsel %vm2271, %v2301, 0.0
        %v2304 = vadd.f32 %v2021, %v2303
        %v2305 = vxor.u32 %v2304, 2147483648
        %v2306 = vmul.f32 %v2305, 1.442695
        %v2307 = vpow.pop %v2306
        %v2308 = vadd.f32 %v2307, 1.0
        %v2309 = vrcp.pop %v2308
        %v2310 = vmul.f32 1.0, %v2309
        %v2312 = vlaneseq
        %v2313 = vshrl.u32 %v2312, 7
        %v2314 = vsub.s32 0, %v2313
        %v2315 = vrot.slane %v2310, %v2314
        %v2316 = vlaneseq
        %v2317 = vshrl.u32 %v2316, 7
        %v2318 = vsub.s32 1, %v2317
        %v2319 = vrot.slane %v2310, %v2318
        %v2320 = vcombine.low %v2315, %v2319
        %v2322 = vmul.f32 %v201, %v2320
        %2323 = vst [vmem:[%s200] sm:$0xff] %v2322
        %s2324 = sand.u32 %s97, 1
        %s2325 = scalar_lea.sflag [#allocation4], %s2324
        %s2326 = sand.u32 %s97, 1
        %s2327 = smul.addr %s2326, 8
        %s2328 = scalar_lea.vmem [#allocation7], %s2327
        // Predicated region
        $region41: #{tpu_custom_call.1} parent=31 // pred_check
          %p2329 = pneg %p107
        $region42: #{tpu_custom_call.1} parent=31 // pred_check_branch
          %2331 = sbr.rel (%p2329) target = $region44
        $region43: #{tpu_custom_call.1} parent=31 // pred_region
          %s2333 = ssub.s32 128, 128
          %2334 = vsyncadd %s2325, %s2333
          %s2335 = smul.addr %s21, 2
          %s2336 = smul.addr %s2335, 64
          %s2337 = scalar_lea.hbm %s3, %s2336
          %s2339 = sshll.u32 %s2328, 4
          %s2340 = int_to_ptr.vmem [resolvable:$true] %s2339
          %2342 = dma.vmem_to_hbm [thread:$0]  %s2340, 128, %s2337, %s2325
        $region44: #{tpu_custom_call.1} parent=31 // pred_fallthru
          _
      $region32: #{tpu_custom_call.1} parent=5 // pred_fallthru
        _
      %p2343 = scmp.le.s32.totalorder 2, %s16
      // Predicated region
      $region45: #{tpu_custom_call.1} parent=5 // pred_check
        %p2344 = pneg %p2343
      $region46: #{tpu_custom_call.1} parent=5 // pred_check_branch
        %2346 = sbr.rel (%p2344) target = $region48
      $region47: #{tpu_custom_call.1} parent=5 // pred_region
        %s2347 = ssub.s32 %s16, 2
        // Predicated region
        $region49: #{tpu_custom_call.1} parent=47 // pred_check
          %p2348 = pneg %p113
        $region50: #{tpu_custom_call.1} parent=47 // pred_check_branch
          %2350 = sbr.rel (%p2348) target = $region52
        $region51: #{tpu_custom_call.1} parent=47 // pred_region
          %s2351 = sand.u32 %s98, 1
          %s2352 = scalar_lea.sflag [#allocation4], %s2351
          %s2353 = sand.u32 %s98, 1
          %s2354 = smul.addr %s2353, 8
          %s2355 = scalar_lea.vmem [#allocation7], %s2354
          %2356 = dma.done %s2352, 128
        $region52: #{tpu_custom_call.1} parent=47 // pred_fallthru
          _
      $region48: #{tpu_custom_call.1} parent=5 // pred_fallthru
        _
    $region6: #{tpu_custom_call.1} parent=1 // loop_footer
      %s20 = sadd.s32 1, %s16
    $region7: #{tpu_custom_call.1} parent=1 // loop_footer_branch
      %15 = sbr.rel target = $region3
    $region8: #{tpu_custom_call.1} parent=1 // loop_exit
      _
    %2357 = vsyncpa [#allocation3], 1
    %s2358 = scalar_lea.sflag [#allocation3], 1
    %2359 = vsyncpa %s2358, 1
    %2360 = vsyncpa [#allocation4], 1
    %s2361 = scalar_lea.sflag [#allocation4], 1
    %2362 = vsyncpa %s2361, 1
    %2363 = vsyncpa [#allocation5], 1
    %s2364 = scalar_lea.sflag [#allocation5], 1
    %2365 = vsyncpa %s2364, 1

</llo_original>
